<compile_context>
chip_gen: v7x
topology: tpu7x:2x2x1
jax: 0.10.0
libtpu: 0.0.40
codegen_flags: <defaults>
</compile_context>

<pallas_src>
import jax
import jax.numpy as jnp
import numpy as np
from jax.experimental import pallas as pl
from jax.experimental.pallas import tpu as pltpu

EPS = 1e-5  # nn.BatchNorm2d default


def basic_block_kernel(x_ref, m1_ref, g1_ref, b1_ref, m2_ref, g2_ref, b2_ref,
                       out_ref):
    N, H, WC = x_ref.shape
    C = g1_ref.shape[-1]
    W = WC // C
    NH = N * H
    inv_cnt = 1.0 / float(N * H * W)

    zrow = jnp.zeros((N, 1, WC), jnp.float32)

    def conv3x3(act, m_ref):
        """act: (N*H, W*C) f32. 3x3 / stride-1 / pad-1 conv as ONE bf16 matmul."""
        a = act.reshape(N, H, WC)
        ap = jnp.concatenate([zrow, a, zrow], axis=1)             # zero H-halo
        lhs = jnp.concatenate([ap[:, dh:dh + H, :] for dh in range(3)],
                              axis=-1).reshape(NH, 3 * WC)        # (N*H, 3*W*C)
        return jnp.dot(lhs.astype(jnp.bfloat16), m_ref[...],
                       preferred_element_type=jnp.float32)        # (N*H, W*C) f32

    def batchnorm(acc, g_ref, b_ref):
        """Training-mode batch stats, one pass, in the lane-dense layout."""
        s = jnp.sum(acc, axis=0, keepdims=True)                   # (1, W*C)
        ss = jnp.sum(acc * acc, axis=0, keepdims=True)            # (1, W*C)
        s_c, ss_c = s[:, 0:C], ss[:, 0:C]
        for w in range(1, W):                                     # fold W reps -> per channel
            s_c = s_c + s[:, w * C:(w + 1) * C]
            ss_c = ss_c + ss[:, w * C:(w + 1) * C]
        mean = s_c * inv_cnt                                      # (1, C)
        var = ss_c * inv_cnt - mean * mean                        # biased variance
        scale = g_ref[...] * jax.lax.rsqrt(var + EPS)             # (1, C)
        shift = b_ref[...] - mean * scale
        scale_t = jnp.concatenate([scale] * W, axis=1)            # (1, W*C)
        shift_t = jnp.concatenate([shift] * W, axis=1)
        return acc * scale_t + shift_t

    x = x_ref[...].reshape(NH, WC)                                # also the residual (f32)
    y1 = jnp.maximum(batchnorm(conv3x3(x, m1_ref), g1_ref, b1_ref), 0.0)
    y2 = batchnorm(conv3x3(y1, m2_ref), g2_ref, b2_ref) + x
    out_ref[...] = jnp.maximum(y2, 0.0)                           # lane-dense store


def fold_conv3x3_weights(w_hwio, W):
    """(3, 3, Cin, Cout) HWIO weights -> (3*W*Cin, W*Cout) banded matrix.

    Row index = dh*(W*Cin) + w_in*Cin + ci, col index = w_out*Cout + co.
    Entry = w[dh, w_in - w_out + 1, ci, co] when |w_in - w_out| <= 1, else 0;
    this folds the kW tap and the W spatial axis of a stride-1, pad-1 conv into
    the matmul (zero-padding on the W boundary is implicit).
    """
    kH, kW, Cin, Cout = w_hwio.shape
    sel = np.zeros((kW, W, W), np.float32)
    for dw in range(kW):
        for wo in range(W):
            wi = wo + dw - 1
            if 0 <= wi < W:
                sel[dw, wi, wo] = 1.0
    m = jnp.einsum("dab,hdio->haibo", jnp.asarray(sel), w_hwio)
    return m.reshape(kH * W * Cin, W * Cout)


def basic_block(x_nchw, params):
    """BasicBlock forward. x_nchw: (N, C, H, W) float32. Returns NCHW float32."""
    # TODO(synk): stride != 1 and a non-None downsample (1x1 conv + BN) are not
    # implemented (this module config is stride=1, downsample=None).
    w1, g1, b1, w2, g2, b2 = params
    x = jnp.transpose(x_nchw, (0, 2, 3, 1))                       # NCHW -> NHWC
    N, H, W, C = x.shape
    x_dense = x.reshape(N, H, W * C)                              # lane-dense input

    m1 = fold_conv3x3_weights(w1, W).astype(jnp.bfloat16)         # (3*W*C, W*C)
    m2 = fold_conv3x3_weights(w2, W).astype(jnp.bfloat16)

    vmem = pl.BlockSpec(memory_space=pltpu.MemorySpace.VMEM)
    out = pl.pallas_call(
        basic_block_kernel,
        out_shape=jax.ShapeDtypeStruct((N * H, W * C), jnp.float32),
        in_specs=[vmem] * 7,
        out_specs=vmem,
        # TODO(synk): at production ResNet shapes, add an H-tiled grid
        # ("parallel" for v7x megacore), two-phase BN statistics, and an
        # explicit pltpu.CompilerParams(vmem_limit_bytes=...).
    )(x_dense, m1, g1.reshape(1, C), b1.reshape(1, C),
      m2, g2.reshape(1, C), b2.reshape(1, C))
    return jnp.transpose(out.reshape(N, H, W, C), (0, 3, 1, 2))   # NHWC -> NCHW


def reference(x_nchw, params):
    """Pure-JAX reference (XLA conv, NHWC). Conv operands in bf16 with f32
    accumulation to match the kernel's MXU precision; BN/elementwise in f32."""
    w1, g1, b1, w2, g2, b2 = params
    x = jnp.transpose(x_nchw, (0, 2, 3, 1))

    def conv(a, w):
        return jax.lax.conv_general_dilated(
            a.astype(jnp.bfloat16), w.astype(jnp.bfloat16),
            window_strides=(1, 1), padding="SAME",
            dimension_numbers=("NHWC", "HWIO", "NHWC"),
            preferred_element_type=jnp.float32)

    def bn(a, g, b):
        m = jnp.mean(a, axis=(0, 1, 2), keepdims=True)
        v = jnp.mean((a - m) ** 2, axis=(0, 1, 2), keepdims=True)
        return (a - m) * jax.lax.rsqrt(v + EPS) * g + b

    h = jax.nn.relu(bn(conv(x, w1), g1, b1))
    h = bn(conv(h, w2), g2, b2) + x
    return jnp.transpose(jax.nn.relu(h), (0, 3, 1, 2))


if __name__ == "__main__":
    # Shapes consistent with BasicBlock(inplanes=8, planes=8, stride=1).
    N, C, H, W = 2, 8, 16, 16
    key = jax.random.PRNGKey(0)
    kx, k1, k2, kg1, kb1, kg2, kb2 = jax.random.split(key, 7)

    x = jax.random.normal(kx, (N, C, H, W), jnp.float32)

    # Conv weights stored HWIO (3, 3, Cin, Cout); PyTorch OIHW weights would be
    # transposed via w.transpose(2, 3, 1, 0) before calling basic_block.
    w1 = 0.1 * jax.random.normal(k1, (3, 3, C, C), jnp.float32)
    w2 = 0.1 * jax.random.normal(k2, (3, 3, C, C), jnp.float32)
    g1 = 1.0 + 0.1 * jax.random.normal(kg1, (C,), jnp.float32)
    b1 = 0.1 * jax.random.normal(kb1, (C,), jnp.float32)
    g2 = 1.0 + 0.1 * jax.random.normal(kg2, (C,), jnp.float32)
    b2 = 0.1 * jax.random.normal(kb2, (C,), jnp.float32)
    params = (w1, g1, b1, w2, g2, b2)

    out = jax.block_until_ready(basic_block(x, params))
    ref = jax.block_until_ready(reference(x, params))

    assert out.shape == (N, C, H, W), out.shape
    max_err = float(jnp.max(jnp.abs(out - ref)))
    assert jnp.allclose(out, ref, atol=1e-2, rtol=1e-2), max_err
    print("KERNEL_OK")
</pallas_src>

<mosaic_0001>
module attributes {stable_mosaic.version = 11 : i64} {
  func.func @basic_block_kernel(%arg0: memref<2x16x128xf32, #tpu.memory_space<vmem>>, %arg1: memref<384x128xbf16, #tpu.memory_space<vmem>>, %arg2: memref<1x8xf32, #tpu.memory_space<vmem>>, %arg3: memref<1x8xf32, #tpu.memory_space<vmem>>, %arg4: memref<384x128xbf16, #tpu.memory_space<vmem>>, %arg5: memref<1x8xf32, #tpu.memory_space<vmem>>, %arg6: memref<1x8xf32, #tpu.memory_space<vmem>>, %arg7: memref<32x128xf32, #tpu.memory_space<vmem>>) attributes {dimension_semantics = [], scalar_prefetch = 0 : i64, scratch_operands = 0 : i64, tpu.core_type = #tpu.core_type<tc>} {
    %cst = arith.constant 0.000000e+00 : f32
    %0 = vector.broadcast %cst : f32 to vector<2x1x128xf32>
    %c0 = arith.constant 0 : index
    %c0_0 = arith.constant 0 : index
    %c0_1 = arith.constant 0 : index
    %1 = vector.load %arg0[%c0, %c0_0, %c0_1] : memref<2x16x128xf32, #tpu.memory_space<vmem>>, vector<2x16x128xf32>
    %2 = vector.shape_cast %1 : vector<2x16x128xf32> to vector<32x128xf32>
    %3 = vector.shape_cast %2 : vector<32x128xf32> to vector<2x16x128xf32>
    %4 = tpu.concatenate %0, %3, %0 in 1 : vector<2x1x128xf32>, vector<2x16x128xf32>, vector<2x1x128xf32> -> vector<2x18x128xf32>
    %5 = vector.extract_strided_slice %4 {offsets = [0, 0, 0], sizes = [2, 16, 128], strides = [1, 1, 1]} : vector<2x18x128xf32> to vector<2x16x128xf32>
    %6 = vector.extract_strided_slice %4 {offsets = [0, 1, 0], sizes = [2, 16, 128], strides = [1, 1, 1]} : vector<2x18x128xf32> to vector<2x16x128xf32>
    %7 = vector.extract_strided_slice %4 {offsets = [0, 2, 0], sizes = [2, 16, 128], strides = [1, 1, 1]} : vector<2x18x128xf32> to vector<2x16x128xf32>
    %8 = tpu.concatenate %5, %6, %7 in 2 : vector<2x16x128xf32>, vector<2x16x128xf32>, vector<2x16x128xf32> -> vector<2x16x384xf32>
    %9 = vector.shape_cast %8 : vector<2x16x384xf32> to vector<32x384xf32>
    %10 = arith.truncf %9 : vector<32x384xf32> to vector<32x384xbf16>
    %c0_2 = arith.constant 0 : index
    %c0_3 = arith.constant 0 : index
    %11 = vector.load %arg1[%c0_2, %c0_3] : memref<384x128xbf16, #tpu.memory_space<vmem>>, vector<384x128xbf16>
    %cst_4 = arith.constant dense<0.000000e+00> : vector<32x128xf32>
    %12 = tpu.matmul %10, %11, %cst_4 {dimension_numbers = #tpu.dot_dimension_numbers<[1], [0], [0], [1], [0, 0, 1, 1], [], []>} : vector<32x384xbf16>, vector<384x128xbf16>, vector<32x128xf32> -> vector<32x128xf32>
    %cst_5 = arith.constant dense<0.000000e+00> : vector<128xf32>
    %13 = vector.multi_reduction <add>, %12, %cst_5 [0] : vector<32x128xf32> to vector<128xf32>
    %14 = vector.shape_cast %13 : vector<128xf32> to vector<1x128xf32>
    %15 = arith.mulf %12, %12 : vector<32x128xf32>
    %cst_6 = arith.constant dense<0.000000e+00> : vector<128xf32>
    %16 = vector.multi_reduction <add>, %15, %cst_6 [0] : vector<32x128xf32> to vector<128xf32>
    %17 = vector.shape_cast %16 : vector<128xf32> to vector<1x128xf32>
    %18 = vector.extract_strided_slice %14 {offsets = [0, 0], sizes = [1, 8], strides = [1, 1]} : vector<1x128xf32> to vector<1x8xf32>
    %19 = vector.extract_strided_slice %17 {offsets = [0, 0], sizes = [1, 8], strides = [1, 1]} : vector<1x128xf32> to vector<1x8xf32>
    %20 = vector.extract_strided_slice %14 {offsets = [0, 8], sizes = [1, 8], strides = [1, 1]} : vector<1x128xf32> to vector<1x8xf32>
    %21 = arith.addf %18, %20 : vector<1x8xf32>
    %22 = vector.extract_strided_slice %17 {offsets = [0, 8], sizes = [1, 8], strides = [1, 1]} : vector<1x128xf32> to vector<1x8xf32>
    %23 = arith.addf %19, %22 : vector<1x8xf32>
    %24 = vector.extract_strided_slice %14 {offsets = [0, 16], sizes = [1, 8], strides = [1, 1]} : vector<1x128xf32> to vector<1x8xf32>
    %25 = arith.addf %21, %24 : vector<1x8xf32>
    %26 = vector.extract_strided_slice %17 {offsets = [0, 16], sizes = [1, 8], strides = [1, 1]} : vector<1x128xf32> to vector<1x8xf32>
    %27 = arith.addf %23, %26 : vector<1x8xf32>
    %28 = vector.extract_strided_slice %14 {offsets = [0, 24], sizes = [1, 8], strides = [1, 1]} : vector<1x128xf32> to vector<1x8xf32>
    %29 = arith.addf %25, %28 : vector<1x8xf32>
    %30 = vector.extract_strided_slice %17 {offsets = [0, 24], sizes = [1, 8], strides = [1, 1]} : vector<1x128xf32> to vector<1x8xf32>
    %31 = arith.addf %27, %30 : vector<1x8xf32>
    %32 = vector.extract_strided_slice %14 {offsets = [0, 32], sizes = [1, 8], strides = [1, 1]} : vector<1x128xf32> to vector<1x8xf32>
    %33 = arith.addf %29, %32 : vector<1x8xf32>
    %34 = vector.extract_strided_slice %17 {offsets = [0, 32], sizes = [1, 8], strides = [1, 1]} : vector<1x128xf32> to vector<1x8xf32>
    %35 = arith.addf %31, %34 : vector<1x8xf32>
    %36 = vector.extract_strided_slice %14 {offsets = [0, 40], sizes = [1, 8], strides = [1, 1]} : vector<1x128xf32> to vector<1x8xf32>
    %37 = arith.addf %33, %36 : vector<1x8xf32>
    %38 = vector.extract_strided_slice %17 {offsets = [0, 40], sizes = [1, 8], strides = [1, 1]} : vector<1x128xf32> to vector<1x8xf32>
    %39 = arith.addf %35, %38 : vector<1x8xf32>
    %40 = vector.extract_strided_slice %14 {offsets = [0, 48], sizes = [1, 8], strides = [1, 1]} : vector<1x128xf32> to vector<1x8xf32>
    %41 = arith.addf %37, %40 : vector<1x8xf32>
    %42 = vector.extract_strided_slice %17 {offsets = [0, 48], sizes = [1, 8], strides = [1, 1]} : vector<1x128xf32> to vector<1x8xf32>
    %43 = arith.addf %39, %42 : vector<1x8xf32>
    %44 = vector.extract_strided_slice %14 {offsets = [0, 56], sizes = [1, 8], strides = [1, 1]} : vector<1x128xf32> to vector<1x8xf32>
    %45 = arith.addf %41, %44 : vector<1x8xf32>
    %46 = vector.extract_strided_slice %17 {offsets = [0, 56], sizes = [1, 8], strides = [1, 1]} : vector<1x128xf32> to vector<1x8xf32>
    %47 = arith.addf %43, %46 : vector<1x8xf32>
    %48 = vector.extract_strided_slice %14 {offsets = [0, 64], sizes = [1, 8], strides = [1, 1]} : vector<1x128xf32> to vector<1x8xf32>
    %49 = arith.addf %45, %48 : vector<1x8xf32>
    %50 = vector.extract_strided_slice %17 {offsets = [0, 64], sizes = [1, 8], strides = [1, 1]} : vector<1x128xf32> to vector<1x8xf32>
    %51 = arith.addf %47, %50 : vector<1x8xf32>
    %52 = vector.extract_strided_slice %14 {offsets = [0, 72], sizes = [1, 8], strides = [1, 1]} : vector<1x128xf32> to vector<1x8xf32>
    %53 = arith.addf %49, %52 : vector<1x8xf32>
    %54 = vector.extract_strided_slice %17 {offsets = [0, 72], sizes = [1, 8], strides = [1, 1]} : vector<1x128xf32> to vector<1x8xf32>
    %55 = arith.addf %51, %54 : vector<1x8xf32>
    %56 = vector.extract_strided_slice %14 {offsets = [0, 80], sizes = [1, 8], strides = [1, 1]} : vector<1x128xf32> to vector<1x8xf32>
    %57 = arith.addf %53, %56 : vector<1x8xf32>
    %58 = vector.extract_strided_slice %17 {offsets = [0, 80], sizes = [1, 8], strides = [1, 1]} : vector<1x128xf32> to vector<1x8xf32>
    %59 = arith.addf %55, %58 : vector<1x8xf32>
    %60 = vector.extract_strided_slice %14 {offsets = [0, 88], sizes = [1, 8], strides = [1, 1]} : vector<1x128xf32> to vector<1x8xf32>
    %61 = arith.addf %57, %60 : vector<1x8xf32>
    %62 = vector.extract_strided_slice %17 {offsets = [0, 88], sizes = [1, 8], strides = [1, 1]} : vector<1x128xf32> to vector<1x8xf32>
    %63 = arith.addf %59, %62 : vector<1x8xf32>
    %64 = vector.extract_strided_slice %14 {offsets = [0, 96], sizes = [1, 8], strides = [1, 1]} : vector<1x128xf32> to vector<1x8xf32>
    %65 = arith.addf %61, %64 : vector<1x8xf32>
    %66 = vector.extract_strided_slice %17 {offsets = [0, 96], sizes = [1, 8], strides = [1, 1]} : vector<1x128xf32> to vector<1x8xf32>
    %67 = arith.addf %63, %66 : vector<1x8xf32>
    %68 = vector.extract_strided_slice %14 {offsets = [0, 104], sizes = [1, 8], strides = [1, 1]} : vector<1x128xf32> to vector<1x8xf32>
    %69 = arith.addf %65, %68 : vector<1x8xf32>
    %70 = vector.extract_strided_slice %17 {offsets = [0, 104], sizes = [1, 8], strides = [1, 1]} : vector<1x128xf32> to vector<1x8xf32>
    %71 = arith.addf %67, %70 : vector<1x8xf32>
    %72 = vector.extract_strided_slice %14 {offsets = [0, 112], sizes = [1, 8], strides = [1, 1]} : vector<1x128xf32> to vector<1x8xf32>
    %73 = arith.addf %69, %72 : vector<1x8xf32>
    %74 = vector.extract_strided_slice %17 {offsets = [0, 112], sizes = [1, 8], strides = [1, 1]} : vector<1x128xf32> to vector<1x8xf32>
    %75 = arith.addf %71, %74 : vector<1x8xf32>
    %76 = vector.extract_strided_slice %14 {offsets = [0, 120], sizes = [1, 8], strides = [1, 1]} : vector<1x128xf32> to vector<1x8xf32>
    %77 = arith.addf %73, %76 : vector<1x8xf32>
    %78 = vector.extract_strided_slice %17 {offsets = [0, 120], sizes = [1, 8], strides = [1, 1]} : vector<1x128xf32> to vector<1x8xf32>
    %79 = arith.addf %75, %78 : vector<1x8xf32>
    %cst_7 = arith.constant 0.001953125 : f32
    %80 = vector.broadcast %cst_7 : f32 to vector<1x8xf32>
    %81 = arith.mulf %77, %80 : vector<1x8xf32>
    %cst_8 = arith.constant 0.001953125 : f32
    %82 = vector.broadcast %cst_8 : f32 to vector<1x8xf32>
    %83 = arith.mulf %79, %82 : vector<1x8xf32>
    %84 = arith.mulf %81, %81 : vector<1x8xf32>
    %85 = arith.subf %83, %84 : vector<1x8xf32>
    %c0_9 = arith.constant 0 : index
    %c0_10 = arith.constant 0 : index
    %86 = vector.load %arg2[%c0_9, %c0_10] : memref<1x8xf32, #tpu.memory_space<vmem>>, vector<1x8xf32>
    %cst_11 = arith.constant 9.99999974E-6 : f32
    %87 = vector.broadcast %cst_11 : f32 to vector<1x8xf32>
    %88 = arith.addf %85, %87 : vector<1x8xf32>
    %89 = math.rsqrt %88 : vector<1x8xf32>
    %90 = arith.mulf %86, %89 : vector<1x8xf32>
    %c0_12 = arith.constant 0 : index
    %c0_13 = arith.constant 0 : index
    %91 = vector.load %arg3[%c0_12, %c0_13] : memref<1x8xf32, #tpu.memory_space<vmem>>, vector<1x8xf32>
    %92 = arith.mulf %81, %90 : vector<1x8xf32>
    %93 = arith.subf %91, %92 : vector<1x8xf32>
    %94 = tpu.concatenate %90, %90, %90, %90, %90, %90, %90, %90, %90, %90, %90, %90, %90, %90, %90, %90 in 1 : vector<1x8xf32>, vector<1x8xf32>, vector<1x8xf32>, vector<1x8xf32>, vector<1x8xf32>, vector<1x8xf32>, vector<1x8xf32>, vector<1x8xf32>, vector<1x8xf32>, vector<1x8xf32>, vector<1x8xf32>, vector<1x8xf32>, vector<1x8xf32>, vector<1x8xf32>, vector<1x8xf32>, vector<1x8xf32> -> vector<1x128xf32>
    %95 = tpu.concatenate %93, %93, %93, %93, %93, %93, %93, %93, %93, %93, %93, %93, %93, %93, %93, %93 in 1 : vector<1x8xf32>, vector<1x8xf32>, vector<1x8xf32>, vector<1x8xf32>, vector<1x8xf32>, vector<1x8xf32>, vector<1x8xf32>, vector<1x8xf32>, vector<1x8xf32>, vector<1x8xf32>, vector<1x8xf32>, vector<1x8xf32>, vector<1x8xf32>, vector<1x8xf32>, vector<1x8xf32>, vector<1x8xf32> -> vector<1x128xf32>
    %96 = vector.broadcast %94 : vector<1x128xf32> to vector<32x128xf32>
    %97 = arith.mulf %12, %96 : vector<32x128xf32>
    %98 = vector.broadcast %95 : vector<1x128xf32> to vector<32x128xf32>
    %99 = arith.addf %97, %98 : vector<32x128xf32>
    %cst_14 = arith.constant 0.000000e+00 : f32
    %100 = vector.broadcast %cst_14 : f32 to vector<32x128xf32>
    %101 = arith.maximumf %99, %100 : vector<32x128xf32>
    %102 = vector.shape_cast %101 : vector<32x128xf32> to vector<2x16x128xf32>
    %103 = tpu.concatenate %0, %102, %0 in 1 : vector<2x1x128xf32>, vector<2x16x128xf32>, vector<2x1x128xf32> -> vector<2x18x128xf32>
    %104 = vector.extract_strided_slice %103 {offsets = [0, 0, 0], sizes = [2, 16, 128], strides = [1, 1, 1]} : vector<2x18x128xf32> to vector<2x16x128xf32>
    %105 = vector.extract_strided_slice %103 {offsets = [0, 1, 0], sizes = [2, 16, 128], strides = [1, 1, 1]} : vector<2x18x128xf32> to vector<2x16x128xf32>
    %106 = vector.extract_strided_slice %103 {offsets = [0, 2, 0], sizes = [2, 16, 128], strides = [1, 1, 1]} : vector<2x18x128xf32> to vector<2x16x128xf32>
    %107 = tpu.concatenate %104, %105, %106 in 2 : vector<2x16x128xf32>, vector<2x16x128xf32>, vector<2x16x128xf32> -> vector<2x16x384xf32>
    %108 = vector.shape_cast %107 : vector<2x16x384xf32> to vector<32x384xf32>
    %109 = arith.truncf %108 : vector<32x384xf32> to vector<32x384xbf16>
    %c0_15 = arith.constant 0 : index
    %c0_16 = arith.constant 0 : index
    %110 = vector.load %arg4[%c0_15, %c0_16] : memref<384x128xbf16, #tpu.memory_space<vmem>>, vector<384x128xbf16>
    %cst_17 = arith.constant dense<0.000000e+00> : vector<32x128xf32>
    %111 = tpu.matmul %109, %110, %cst_17 {dimension_numbers = #tpu.dot_dimension_numbers<[1], [0], [0], [1], [0, 0, 1, 1], [], []>} : vector<32x384xbf16>, vector<384x128xbf16>, vector<32x128xf32> -> vector<32x128xf32>
    %cst_18 = arith.constant dense<0.000000e+00> : vector<128xf32>
    %112 = vector.multi_reduction <add>, %111, %cst_18 [0] : vector<32x128xf32> to vector<128xf32>
    %113 = vector.shape_cast %112 : vector<128xf32> to vector<1x128xf32>
    %114 = arith.mulf %111, %111 : vector<32x128xf32>
    %cst_19 = arith.constant dense<0.000000e+00> : vector<128xf32>
    %115 = vector.multi_reduction <add>, %114, %cst_19 [0] : vector<32x128xf32> to vector<128xf32>
    %116 = vector.shape_cast %115 : vector<128xf32> to vector<1x128xf32>
    %117 = vector.extract_strided_slice %113 {offsets = [0, 0], sizes = [1, 8], strides = [1, 1]} : vector<1x128xf32> to vector<1x8xf32>
    %118 = vector.extract_strided_slice %116 {offsets = [0, 0], sizes = [1, 8], strides = [1, 1]} : vector<1x128xf32> to vector<1x8xf32>
    %119 = vector.extract_strided_slice %113 {offsets = [0, 8], sizes = [1, 8], strides = [1, 1]} : vector<1x128xf32> to vector<1x8xf32>
    %120 = arith.addf %117, %119 : vector<1x8xf32>
    %121 = vector.extract_strided_slice %116 {offsets = [0, 8], sizes = [1, 8], strides = [1, 1]} : vector<1x128xf32> to vector<1x8xf32>
    %122 = arith.addf %118, %121 : vector<1x8xf32>
    %123 = vector.extract_strided_slice %113 {offsets = [0, 16], sizes = [1, 8], strides = [1, 1]} : vector<1x128xf32> to vector<1x8xf32>
    %124 = arith.addf %120, %123 : vector<1x8xf32>
    %125 = vector.extract_strided_slice %116 {offsets = [0, 16], sizes = [1, 8], strides = [1, 1]} : vector<1x128xf32> to vector<1x8xf32>
    %126 = arith.addf %122, %125 : vector<1x8xf32>
    %127 = vector.extract_strided_slice %113 {offsets = [0, 24], sizes = [1, 8], strides = [1, 1]} : vector<1x128xf32> to vector<1x8xf32>
    %128 = arith.addf %124, %127 : vector<1x8xf32>
    %129 = vector.extract_strided_slice %116 {offsets = [0, 24], sizes = [1, 8], strides = [1, 1]} : vector<1x128xf32> to vector<1x8xf32>
    %130 = arith.addf %126, %129 : vector<1x8xf32>
    %131 = vector.extract_strided_slice %113 {offsets = [0, 32], sizes = [1, 8], strides = [1, 1]} : vector<1x128xf32> to vector<1x8xf32>
    %132 = arith.addf %128, %131 : vector<1x8xf32>
    %133 = vector.extract_strided_slice %116 {offsets = [0, 32], sizes = [1, 8], strides = [1, 1]} : vector<1x128xf32> to vector<1x8xf32>
    %134 = arith.addf %130, %133 : vector<1x8xf32>
    %135 = vector.extract_strided_slice %113 {offsets = [0, 40], sizes = [1, 8], strides = [1, 1]} : vector<1x128xf32> to vector<1x8xf32>
    %136 = arith.addf %132, %135 : vector<1x8xf32>
    %137 = vector.extract_strided_slice %116 {offsets = [0, 40], sizes = [1, 8], strides = [1, 1]} : vector<1x128xf32> to vector<1x8xf32>
    %138 = arith.addf %134, %137 : vector<1x8xf32>
    %139 = vector.extract_strided_slice %113 {offsets = [0, 48], sizes = [1, 8], strides = [1, 1]} : vector<1x128xf32> to vector<1x8xf32>
    %140 = arith.addf %136, %139 : vector<1x8xf32>
    %141 = vector.extract_strided_slice %116 {offsets = [0, 48], sizes = [1, 8], strides = [1, 1]} : vector<1x128xf32> to vector<1x8xf32>
    %142 = arith.addf %138, %141 : vector<1x8xf32>
    %143 = vector.extract_strided_slice %113 {offsets = [0, 56], sizes = [1, 8], strides = [1, 1]} : vector<1x128xf32> to vector<1x8xf32>
    %144 = arith.addf %140, %143 : vector<1x8xf32>
    %145 = vector.extract_strided_slice %116 {offsets = [0, 56], sizes = [1, 8], strides = [1, 1]} : vector<1x128xf32> to vector<1x8xf32>
    %146 = arith.addf %142, %145 : vector<1x8xf32>
    %147 = vector.extract_strided_slice %113 {offsets = [0, 64], sizes = [1, 8], strides = [1, 1]} : vector<1x128xf32> to vector<1x8xf32>
    %148 = arith.addf %144, %147 : vector<1x8xf32>
    %149 = vector.extract_strided_slice %116 {offsets = [0, 64], sizes = [1, 8], strides = [1, 1]} : vector<1x128xf32> to vector<1x8xf32>
    %150 = arith.addf %146, %149 : vector<1x8xf32>
    %151 = vector.extract_strided_slice %113 {offsets = [0, 72], sizes = [1, 8], strides = [1, 1]} : vector<1x128xf32> to vector<1x8xf32>
    %152 = arith.addf %148, %151 : vector<1x8xf32>
    %153 = vector.extract_strided_slice %116 {offsets = [0, 72], sizes = [1, 8], strides = [1, 1]} : vector<1x128xf32> to vector<1x8xf32>
    %154 = arith.addf %150, %153 : vector<1x8xf32>
    %155 = vector.extract_strided_slice %113 {offsets = [0, 80], sizes = [1, 8], strides = [1, 1]} : vector<1x128xf32> to vector<1x8xf32>
    %156 = arith.addf %152, %155 : vector<1x8xf32>
    %157 = vector.extract_strided_slice %116 {offsets = [0, 80], sizes = [1, 8], strides = [1, 1]} : vector<1x128xf32> to vector<1x8xf32>
    %158 = arith.addf %154, %157 : vector<1x8xf32>
    %159 = vector.extract_strided_slice %113 {offsets = [0, 88], sizes = [1, 8], strides = [1, 1]} : vector<1x128xf32> to vector<1x8xf32>
    %160 = arith.addf %156, %159 : vector<1x8xf32>
    %161 = vector.extract_strided_slice %116 {offsets = [0, 88], sizes = [1, 8], strides = [1, 1]} : vector<1x128xf32> to vector<1x8xf32>
    %162 = arith.addf %158, %161 : vector<1x8xf32>
    %163 = vector.extract_strided_slice %113 {offsets = [0, 96], sizes = [1, 8], strides = [1, 1]} : vector<1x128xf32> to vector<1x8xf32>
    %164 = arith.addf %160, %163 : vector<1x8xf32>
    %165 = vector.extract_strided_slice %116 {offsets = [0, 96], sizes = [1, 8], strides = [1, 1]} : vector<1x128xf32> to vector<1x8xf32>
    %166 = arith.addf %162, %165 : vector<1x8xf32>
    %167 = vector.extract_strided_slice %113 {offsets = [0, 104], sizes = [1, 8], strides = [1, 1]} : vector<1x128xf32> to vector<1x8xf32>
    %168 = arith.addf %164, %167 : vector<1x8xf32>
    %169 = vector.extract_strided_slice %116 {offsets = [0, 104], sizes = [1, 8], strides = [1, 1]} : vector<1x128xf32> to vector<1x8xf32>
    %170 = arith.addf %166, %169 : vector<1x8xf32>
    %171 = vector.extract_strided_slice %113 {offsets = [0, 112], sizes = [1, 8], strides = [1, 1]} : vector<1x128xf32> to vector<1x8xf32>
    %172 = arith.addf %168, %171 : vector<1x8xf32>
    %173 = vector.extract_strided_slice %116 {offsets = [0, 112], sizes = [1, 8], strides = [1, 1]} : vector<1x128xf32> to vector<1x8xf32>
    %174 = arith.addf %170, %173 : vector<1x8xf32>
    %175 = vector.extract_strided_slice %113 {offsets = [0, 120], sizes = [1, 8], strides = [1, 1]} : vector<1x128xf32> to vector<1x8xf32>
    %176 = arith.addf %172, %175 : vector<1x8xf32>
    %177 = vector.extract_strided_slice %116 {offsets = [0, 120], sizes = [1, 8], strides = [1, 1]} : vector<1x128xf32> to vector<1x8xf32>
    %178 = arith.addf %174, %177 : vector<1x8xf32>
    %cst_20 = arith.constant 0.001953125 : f32
    %179 = vector.broadcast %cst_20 : f32 to vector<1x8xf32>
    %180 = arith.mulf %176, %179 : vector<1x8xf32>
    %cst_21 = arith.constant 0.001953125 : f32
    %181 = vector.broadcast %cst_21 : f32 to vector<1x8xf32>
    %182 = arith.mulf %178, %181 : vector<1x8xf32>
    %183 = arith.mulf %180, %180 : vector<1x8xf32>
    %184 = arith.subf %182, %183 : vector<1x8xf32>
    %c0_22 = arith.constant 0 : index
    %c0_23 = arith.constant 0 : index
    %185 = vector.load %arg5[%c0_22, %c0_23] : memref<1x8xf32, #tpu.memory_space<vmem>>, vector<1x8xf32>
    %cst_24 = arith.constant 9.99999974E-6 : f32
    %186 = vector.broadcast %cst_24 : f32 to vector<1x8xf32>
    %187 = arith.addf %184, %186 : vector<1x8xf32>
    %188 = math.rsqrt %187 : vector<1x8xf32>
    %189 = arith.mulf %185, %188 : vector<1x8xf32>
    %c0_25 = arith.constant 0 : index
    %c0_26 = arith.constant 0 : index
    %190 = vector.load %arg6[%c0_25, %c0_26] : memref<1x8xf32, #tpu.memory_space<vmem>>, vector<1x8xf32>
    %191 = arith.mulf %180, %189 : vector<1x8xf32>
    %192 = arith.subf %190, %191 : vector<1x8xf32>
    %193 = tpu.concatenate %189, %189, %189, %189, %189, %189, %189, %189, %189, %189, %189, %189, %189, %189, %189, %189 in 1 : vector<1x8xf32>, vector<1x8xf32>, vector<1x8xf32>, vector<1x8xf32>, vector<1x8xf32>, vector<1x8xf32>, vector<1x8xf32>, vector<1x8xf32>, vector<1x8xf32>, vector<1x8xf32>, vector<1x8xf32>, vector<1x8xf32>, vector<1x8xf32>, vector<1x8xf32>, vector<1x8xf32>, vector<1x8xf32> -> vector<1x128xf32>
    %194 = tpu.concatenate %192, %192, %192, %192, %192, %192, %192, %192, %192, %192, %192, %192, %192, %192, %192, %192 in 1 : vector<1x8xf32>, vector<1x8xf32>, vector<1x8xf32>, vector<1x8xf32>, vector<1x8xf32>, vector<1x8xf32>, vector<1x8xf32>, vector<1x8xf32>, vector<1x8xf32>, vector<1x8xf32>, vector<1x8xf32>, vector<1x8xf32>, vector<1x8xf32>, vector<1x8xf32>, vector<1x8xf32>, vector<1x8xf32> -> vector<1x128xf32>
    %195 = vector.broadcast %193 : vector<1x128xf32> to vector<32x128xf32>
    %196 = arith.mulf %111, %195 : vector<32x128xf32>
    %197 = vector.broadcast %194 : vector<1x128xf32> to vector<32x128xf32>
    %198 = arith.addf %196, %197 : vector<32x128xf32>
    %199 = arith.addf %198, %2 : vector<32x128xf32>
    %cst_27 = arith.constant 0.000000e+00 : f32
    %200 = vector.broadcast %cst_27 : f32 to vector<32x128xf32>
    %201 = arith.maximumf %199, %200 : vector<32x128xf32>
    %c0_28 = arith.constant 0 : index
    %c0_29 = arith.constant 0 : index
    %202 = vector.load %arg7[%c0_28, %c0_29] : memref<32x128xf32, #tpu.memory_space<vmem>>, vector<32x128xf32>
    tpu.vector_store %arg7[%c0_28, %c0_29], %201 {strides = array<i32>} : memref<32x128xf32, #tpu.memory_space<vmem>>, vector<32x128xf32>,
    return
  }
}

</mosaic_0001>

<llo_original>
// kernel: tpu_custom_call.1
$region0: #{tpu_custom_call.1}
  #allocation0 [shape = 'u32[]', space=smem, size = 0x4, offset = 0x4, fixed_abs, tag = 'smem constant byte address 0x4 - core index']
  #allocation1 [shape = 'u32[144,128]{1,0:T(1,128)}', space=vmem, size = 0x12000, scoped, tag = 'internal scratch']
  %s0 = inlined_call_operand.hbm [shape: f32[2,16,128], index: 0, kind: input, shape index: {}]
  %s1 = inlined_call_operand.hbm [shape: bf16[384,128], index: 1, kind: input, shape index: {}]
  %s2 = inlined_call_operand.vmem [shape: f32[1,8], index: 2, kind: input, shape index: {}]
  %s3 = inlined_call_operand.vmem [shape: f32[1,8], index: 3, kind: input, shape index: {}]
  %s4 = inlined_call_operand.hbm [shape: bf16[384,128], index: 4, kind: input, shape index: {}]
  %s5 = inlined_call_operand.vmem [shape: f32[1,8], index: 5, kind: input, shape index: {}]
  %s6 = inlined_call_operand.vmem [shape: f32[1,8], index: 6, kind: input, shape index: {}]
  %s7 = inlined_call_operand.hbm [shape: f32[32,128], index: 7, kind: output, shape index: {}]
  %s8 = sld [smem:[#allocation0]]
  $region50: #{tpu_custom_call.1} parent=0
    _
  %s10 = ssub.s32 1, %s8
  %s11 = scalar_select 0, %s10, %s8
  $region1: #{tpu_custom_call.1} parent=0
    #allocation2 [shape = 'u8[16384]{0}', space=vmem, size = 0x4000, scoped, tag = 'input window, operand 0, single buffered']
    #allocation3 [shape = 's32[1]{0}', space=sflag, size = 0x4, scoped, tag = 'scoped memory for tpu_custom_call.1']
    #allocation4 [shape = 's32[1]{0}', space=sflag, size = 0x4, scoped, tag = 'scoped memory for tpu_custom_call.1']
    #allocation5 [shape = 'u8[98304]{0}', space=vmem, size = 0x18000, scoped, tag = 'input window, operand 1, single buffered']
    #allocation6 [shape = 's32[1]{0}', space=sflag, size = 0x4, scoped, tag = 'scoped memory for tpu_custom_call.1']
    #allocation7 [shape = 'u8[98304]{0}', space=vmem, size = 0x18000, scoped, tag = 'input window, operand 4, single buffered']
    #allocation8 [shape = 'u8[16384]{0}', space=vmem, size = 0x4000, scoped, tag = 'output window, operand 0, single buffered']
    %12 = vsyncpa [#allocation3], 0
    %13 = vsyncpa [#allocation6], 0
    %14 = vsyncpa [#allocation4], 0
    // Predicated region
    $region2: #{tpu_custom_call.1} parent=1 // pred_check
      _
    $region3: #{tpu_custom_call.1} parent=1 // pred_check_branch
      %16 = sbr.rel (0) target = $region5
    $region4: #{tpu_custom_call.1} parent=1 // pred_region
      %s18 = ssub.s32 512, 512
      %19 = vsyncadd [#allocation3], %s18
      %s20 = sshll.u32 [#allocation2], 4
      %s21 = int_to_ptr.vmem [resolvable:$true] %s20
      %26 = dma.hbm_to_vmem [thread:$0]  %s0, 512, %s21, [#allocation3], 128, 128, 8
    $region5: #{tpu_custom_call.1} parent=1 // pred_fallthru
      _
    // Predicated region
    $region6: #{tpu_custom_call.1} parent=1 // pred_check
      _
    $region7: #{tpu_custom_call.1} parent=1 // pred_check_branch
      %28 = sbr.rel (0) target = $region9
    $region8: #{tpu_custom_call.1} parent=1 // pred_region
      %s30 = ssub.s32 3072, 3072
      %31 = vsyncadd [#allocation6], %s30
      %s32 = sshll.u32 [#allocation5], 4
      %s33 = int_to_ptr.vmem [resolvable:$true] %s32
      %38 = dma.hbm_to_vmem [thread:$0]  %s1, 3072, %s33, [#allocation6], 64, 64, 4
    $region9: #{tpu_custom_call.1} parent=1 // pred_fallthru
      _
    // Predicated region
    $region10: #{tpu_custom_call.1} parent=1 // pred_check
      _
    $region11: #{tpu_custom_call.1} parent=1 // pred_check_branch
      %40 = sbr.rel (0) target = $region13
    $region12: #{tpu_custom_call.1} parent=1 // pred_region
      _
    $region13: #{tpu_custom_call.1} parent=1 // pred_fallthru
      _
    // Predicated region
    $region14: #{tpu_custom_call.1} parent=1 // pred_check
      _
    $region15: #{tpu_custom_call.1} parent=1 // pred_check_branch
      %42 = sbr.rel (0) target = $region17
    $region16: #{tpu_custom_call.1} parent=1 // pred_region
      _
    $region17: #{tpu_custom_call.1} parent=1 // pred_fallthru
      _
    // Predicated region
    $region18: #{tpu_custom_call.1} parent=1 // pred_check
      _
    $region19: #{tpu_custom_call.1} parent=1 // pred_check_branch
      %44 = sbr.rel (0) target = $region21
    $region20: #{tpu_custom_call.1} parent=1 // pred_region
      %s46 = ssub.s32 3072, 3072
      %47 = vsyncadd [#allocation6], %s46
      %s48 = sshll.u32 [#allocation7], 4
      %s49 = int_to_ptr.vmem [resolvable:$true] %s48
      %54 = dma.hbm_to_vmem [thread:$0]  %s4, 3072, %s49, [#allocation6], 64, 64, 4
    $region21: #{tpu_custom_call.1} parent=1 // pred_fallthru
      _
    // Predicated region
    $region22: #{tpu_custom_call.1} parent=1 // pred_check
      _
    $region23: #{tpu_custom_call.1} parent=1 // pred_check_branch
      %56 = sbr.rel (0) target = $region25
    $region24: #{tpu_custom_call.1} parent=1 // pred_region
      _
    $region25: #{tpu_custom_call.1} parent=1 // pred_fallthru
      _
    // Predicated region
    $region26: #{tpu_custom_call.1} parent=1 // pred_check
      _
    $region27: #{tpu_custom_call.1} parent=1 // pred_check_branch
      %58 = sbr.rel (0) target = $region29
    $region28: #{tpu_custom_call.1} parent=1 // pred_region
      _
    $region29: #{tpu_custom_call.1} parent=1 // pred_fallthru
      _
    // Predicated region
    $region30: #{tpu_custom_call.1} parent=1 // pred_check
      _
    $region31: #{tpu_custom_call.1} parent=1 // pred_check_branch
      %60 = sbr.rel (0) target = $region33
    $region32: #{tpu_custom_call.1} parent=1 // pred_region
      %61 = dma.done [#allocation3], 512
    $region33: #{tpu_custom_call.1} parent=1 // pred_fallthru
      _
    // Predicated region
    $region34: #{tpu_custom_call.1} parent=1 // pred_check
      _
    $region35: #{tpu_custom_call.1} parent=1 // pred_check_branch
      %63 = sbr.rel (0) target = $region37
    $region36: #{tpu_custom_call.1} parent=1 // pred_region
      %64 = dma.done [#allocation6], 3072
    $region37: #{tpu_custom_call.1} parent=1 // pred_fallthru
      _
    // Predicated region
    $region38: #{tpu_custom_call.1} parent=1 // pred_check
      _
    $region39: #{tpu_custom_call.1} parent=1 // pred_check_branch
      %66 = sbr.rel (0) target = $region41
    $region40: #{tpu_custom_call.1} parent=1 // pred_region
      %67 = dma.done [#allocation6], 3072
    $region41: #{tpu_custom_call.1} parent=1 // pred_fallthru
      _
    %v69 = vld [vmem:[#allocation2] sm:$0xff]
    %v70 = vld [vmem:[#allocation2 + $0x8] sm:$0xff]
    %v71 = vld [vmem:[#allocation2 + $0x10] sm:$0xff]
    %v72 = vld [vmem:[#allocation2 + $0x18] sm:$0xff]
    %vm77 = vcmask 1040384
    %v78 = vrot.slane %v69, 7
    %v79 = vrot.slane %v70, 7
    %v80 = vsel %vm77, %v78, %v79
    %v81 = vrot.slane %v71, 7
    %v82 = vrot.slane %v72, 7
    %v83 = vsel %vm77, %v81, %v82
    %v90 = vsel %vm77, 0.0, %v78
    %v91 = vsel %vm77, 0.0, %v81
    %v92 = vsel %vm77, %v79, 0.0
    %v93 = vsel %vm77, %v82, 0.0
    %vm98 = vcmask 1046528
    %v99 = vrot.slane %v90, 1
    %v100 = vrot.slane %v80, 1
    %v101 = vsel %vm98, %v99, %v100
    %v102 = vrot.slane %v92, 1
    %v103 = vsel %vm98, %v100, %v102
    %v104 = vrot.slane %v91, 1
    %v105 = vrot.slane %v83, 1
    %v106 = vsel %vm98, %v104, %v105
    %v107 = vrot.slane %v93, 1
    %v108 = vsel %vm98, %v105, %v107
    %vm113 = vcmask 1045504
    %v114 = vrot.slane %v90, 2
    %v115 = vrot.slane %v80, 2
    %v116 = vsel %vm113, %v114, %v115
    %v117 = vrot.slane %v92, 2
    %v118 = vsel %vm113, %v115, %v117
    %v119 = vrot.slane %v91, 2
    %v120 = vrot.slane %v83, 2
    %v121 = vsel %vm113, %v119, %v120
    %v122 = vrot.slane %v93, 2
    %v123 = vsel %vm113, %v120, %v122
    %v128 = vpack.c.bf16 %v80, %v90
    %v129 = vpack.c.bf16 %v103, %v101
    %v130 = vpack.c.bf16 %v118, %v116
    %v131 = vpack.c.bf16 %v83, %v91
    %v132 = vpack.c.bf16 %v108, %v106
    %v133 = vpack.c.bf16 %v123, %v121
    %v134 = vld [vmem:[#allocation5] sm:$0xf]
    %v135 = vld [vmem:[#allocation5 + $0x4] sm:$0xf]
    %v136 = vld [vmem:[#allocation5 + $0x8] sm:$0xf]
    %v137 = vld [vmem:[#allocation5 + $0xc] sm:$0xf]
    %v138 = vld [vmem:[#allocation5 + $0x10] sm:$0xf]
    %v139 = vld [vmem:[#allocation5 + $0x14] sm:$0xf]
    %v140 = vld [vmem:[#allocation5 + $0x18] sm:$0xf]
    %v141 = vld [vmem:[#allocation5 + $0x1c] sm:$0xf]
    %v142 = vld [vmem:[#allocation5 + $0x20] sm:$0xf]
    %v143 = vld [vmem:[#allocation5 + $0x24] sm:$0xf]
    %v144 = vld [vmem:[#allocation5 + $0x28] sm:$0xf]
    %v145 = vld [vmem:[#allocation5 + $0x2c] sm:$0xf]
    %v146 = vld [vmem:[#allocation5 + $0x30] sm:$0xf]
    %v147 = vld [vmem:[#allocation5 + $0x34] sm:$0xf]
    %v148 = vld [vmem:[#allocation5 + $0x38] sm:$0xf]
    %v149 = vld [vmem:[#allocation5 + $0x3c] sm:$0xf]
    %v150 = vld [vmem:[#allocation5 + $0x40] sm:$0xf]
    %v151 = vld [vmem:[#allocation5 + $0x44] sm:$0xf]
    %v152 = vld [vmem:[#allocation5 + $0x48] sm:$0xf]
    %v153 = vld [vmem:[#allocation5 + $0x4c] sm:$0xf]
    %v154 = vld [vmem:[#allocation5 + $0x50] sm:$0xf]
    %v155 = vld [vmem:[#allocation5 + $0x54] sm:$0xf]
    %v156 = vld [vmem:[#allocation5 + $0x58] sm:$0xf]
    %v157 = vld [vmem:[#allocation5 + $0x5c] sm:$0xf]
    %v158 = vld [vmem:[#allocation5 + $0x60] sm:$0xf]
    %v159 = vld [vmem:[#allocation5 + $0x64] sm:$0xf]
    %v160 = vld [vmem:[#allocation5 + $0x68] sm:$0xf]
    %v161 = vld [vmem:[#allocation5 + $0x6c] sm:$0xf]
    %v162 = vld [vmem:[#allocation5 + $0x70] sm:$0xf]
    %v163 = vld [vmem:[#allocation5 + $0x74] sm:$0xf]
    %v164 = vld [vmem:[#allocation5 + $0x78] sm:$0xf]
    %v165 = vld [vmem:[#allocation5 + $0x7c] sm:$0xf]
    %v166 = vld [vmem:[#allocation5 + $0x80] sm:$0xf]
    %v167 = vld [vmem:[#allocation5 + $0x84] sm:$0xf]
    %v168 = vld [vmem:[#allocation5 + $0x88] sm:$0xf]
    %v169 = vld [vmem:[#allocation5 + $0x8c] sm:$0xf]
    %v170 = vld [vmem:[#allocation5 + $0x90] sm:$0xf]
    %v171 = vld [vmem:[#allocation5 + $0x94] sm:$0xf]
    %v172 = vld [vmem:[#allocation5 + $0x98] sm:$0xf]
    %v173 = vld [vmem:[#allocation5 + $0x9c] sm:$0xf]
    %v174 = vld [vmem:[#allocation5 + $0xa0] sm:$0xf]
    %v175 = vld [vmem:[#allocation5 + $0xa4] sm:$0xf]
    %v176 = vld [vmem:[#allocation5 + $0xa8] sm:$0xf]
    %v177 = vld [vmem:[#allocation5 + $0xac] sm:$0xf]
    %v178 = vld [vmem:[#allocation5 + $0xb0] sm:$0xf]
    %v179 = vld [vmem:[#allocation5 + $0xb4] sm:$0xf]
    %v180 = vld [vmem:[#allocation5 + $0xb8] sm:$0xf]
    %v181 = vld [vmem:[#allocation5 + $0xbc] sm:$0xf]
    %v230 = vunpack.c.l.b16 %v134
    %v231 = vunpack.c.l.b16 %v135
    %v232 = vunpack.c.l.b16 %v136
    %v233 = vunpack.c.l.b16 %v137
    %v234 = vunpack.c.l.b16 %v138
    %v235 = vunpack.c.l.b16 %v139
    %v236 = vunpack.c.l.b16 %v140
    %v237 = vunpack.c.l.b16 %v141
    %v238 = vunpack.c.l.b16 %v142
    %v239 = vunpack.c.l.b16 %v143
    %v240 = vunpack.c.l.b16 %v144
    %v241 = vunpack.c.l.b16 %v145
    %v242 = vunpack.c.l.b16 %v146
    %v243 = vunpack.c.l.b16 %v147
    %v244 = vunpack.c.l.b16 %v148
    %v245 = vunpack.c.l.b16 %v149
    %v246 = vunpack.c.l.b16 %v150
    %v247 = vunpack.c.l.b16 %v151
    %v248 = vunpack.c.l.b16 %v152
    %v249 = vunpack.c.l.b16 %v153
    %v250 = vunpack.c.l.b16 %v154
    %v251 = vunpack.c.l.b16 %v155
    %v252 = vunpack.c.l.b16 %v156
    %v253 = vunpack.c.l.b16 %v157
    %v254 = vunpack.c.l.b16 %v158
    %v255 = vunpack.c.l.b16 %v159
    %v256 = vunpack.c.l.b16 %v160
    %v257 = vunpack.c.l.b16 %v161
    %v258 = vunpack.c.l.b16 %v162
    %v259 = vunpack.c.l.b16 %v163
    %v260 = vunpack.c.l.b16 %v164
    %v261 = vunpack.c.l.b16 %v165
    %v262 = vunpack.c.l.b16 %v166
    %v263 = vunpack.c.l.b16 %v167
    %v264 = vunpack.c.l.b16 %v168
    %v265 = vunpack.c.l.b16 %v169
    %v266 = vunpack.c.l.b16 %v170
    %v267 = vunpack.c.l.b16 %v171
    %v268 = vunpack.c.l.b16 %v172
    %v269 = vunpack.c.l.b16 %v173
    %v270 = vunpack.c.l.b16 %v174
    %v271 = vunpack.c.l.b16 %v175
    %v272 = vunpack.c.l.b16 %v176
    %v273 = vunpack.c.l.b16 %v177
    %v274 = vunpack.c.l.b16 %v178
    %v275 = vunpack.c.l.b16 %v179
    %v276 = vunpack.c.l.b16 %v180
    %v277 = vunpack.c.l.b16 %v181
    %v278 = vpack.c.b16 %v231, %v230
    %v279 = vpack.c.b16 %v233, %v232
    %v280 = vpack.c.b16 %v235, %v234
    %v281 = vpack.c.b16 %v237, %v236
    %v282 = vpack.c.b16 %v239, %v238
    %v283 = vpack.c.b16 %v241, %v240
    %v284 = vpack.c.b16 %v243, %v242
    %v285 = vpack.c.b16 %v245, %v244
    %v286 = vpack.c.b16 %v247, %v246
    %v287 = vpack.c.b16 %v249, %v248
    %v288 = vpack.c.b16 %v251, %v250
    %v289 = vpack.c.b16 %v253, %v252
    %v290 = vpack.c.b16 %v255, %v254
    %v291 = vpack.c.b16 %v257, %v256
    %v292 = vpack.c.b16 %v259, %v258
    %v293 = vpack.c.b16 %v261, %v260
    %v294 = vpack.c.b16 %v263, %v262
    %v295 = vpack.c.b16 %v265, %v264
    %v296 = vpack.c.b16 %v267, %v266
    %v297 = vpack.c.b16 %v269, %v268
    %v298 = vpack.c.b16 %v271, %v270
    %v299 = vpack.c.b16 %v273, %v272
    %v300 = vpack.c.b16 %v275, %v274
    %v301 = vpack.c.b16 %v277, %v276
    %326 = vmatprep.subr.bf16.mxu0 0
    %327 = vmatpush1.bf16.msra.mxu0 %v278
    %328 = vmatprep.subr.bf16.mxu0 0
    %329 = vmatpush1.bf16.msra.mxu0 %v279
    %330 = vmatprep.subr.bf16.mxu0 0
    %331 = vmatpush1.bf16.msra.mxu0 %v280
    %332 = vmatprep.subr.bf16.mxu0 0
    %333 = vmatpush1.bf16.msra.mxu0 %v281
    %334 = vmatprep.subr.bf16.mxu0 0
    %335 = vmatpush1.bf16.msra.mxu0 %v282
    %336 = vmatprep.subr.bf16.mxu0 0
    %337 = vmatpush1.bf16.msra.mxu0 %v283
    %338 = vmatprep.subr.bf16.mxu0 0
    %339 = vmatpush1.bf16.msra.mxu0 %v284
    %340 = vmatprep.subr.bf16.mxu0 0
    %341 = vmatpush1.bf16.msra.mxu0 %v285
    %342 = vmatprep.subr.bf16.mxu0 0
    %343 = vmatpush1.bf16.msra.mxu0 %v286
    %344 = vmatprep.subr.bf16.mxu0 0
    %345 = vmatpush1.bf16.msra.mxu0 %v287
    %346 = vmatprep.subr.bf16.mxu0 0
    %347 = vmatpush1.bf16.msra.mxu0 %v288
    %348 = vmatprep.subr.bf16.mxu0 0
    %349 = vmatpush1.bf16.msra.mxu0 %v289
    %350 = vmatprep.subr.bf16.mxu0 0
    %351 = vmatpush1.bf16.msra.mxu0 %v290
    %352 = vmatprep.subr.bf16.mxu0 0
    %353 = vmatpush1.bf16.msra.mxu0 %v291
    %354 = vmatprep.subr.bf16.mxu0 0
    %355 = vmatpush1.bf16.msra.mxu0 %v292
    %356 = vmatprep.subr.bf16.mxu0 0
    %357 = vmatpush1.bf16.msra.mxu0 %v293
    %358 = vmatprep.mubr.bf16.mxu0 %v129
    %359 = vmatmul.mubr.bf16.gmra.mrb[0].mxu0 %v128
    %v360 = vpop.f32.mrb[0].mxu0
    %v361 = vadd.f32 0.0, %v360
    %v362 = vpop.f32.mrb[0].mxu0
    %v363 = vpop.f32.mrb[0].mxu0
    %v364 = vadd.f32 0.0, %v363
    %v365 = vpop.f32.mrb[0].mxu0
    %366 = vmatprep.mubr.bf16.mxu0 %v132
    %367 = vmatmul.mubr.bf16.gmra.mrb[0].mxu0 %v131
    %v368 = vpop.f32.mrb[0].mxu0
    %v369 = vadd.f32 0.0, %v368
    %v370 = vpop.f32.mrb[0].mxu0
    %v371 = vpop.f32.mrb[0].mxu0
    %v372 = vadd.f32 0.0, %v371
    %v373 = vpop.f32.mrb[0].mxu0
    %374 = vdwg.mxu0
    %375 = vmatprep.subr.bf16.mxu0 0
    %376 = vmatpush1.bf16.msra.mxu0 %v294
    %377 = vmatprep.subr.bf16.mxu0 0
    %378 = vmatpush1.bf16.msra.mxu0 %v295
    %379 = vmatprep.subr.bf16.mxu0 0
    %380 = vmatpush1.bf16.msra.mxu0 %v296
    %381 = vmatprep.subr.bf16.mxu0 0
    %382 = vmatpush1.bf16.msra.mxu0 %v297
    %383 = vmatprep.subr.bf16.mxu0 0
    %384 = vmatpush1.bf16.msra.mxu0 %v298
    %385 = vmatprep.subr.bf16.mxu0 0
    %386 = vmatpush1.bf16.msra.mxu0 %v299
    %387 = vmatprep.subr.bf16.mxu0 0
    %388 = vmatpush1.bf16.msra.mxu0 %v300
    %389 = vmatprep.subr.bf16.mxu0 0
    %390 = vmatpush1.bf16.msra.mxu0 %v301
    %391 = vmatprep.subr.bf16.mxu0 0
    %392 = vmatpush1.bf16.msra.mxu0 0
    %393 = vmatprep.subr.bf16.mxu0 0
    %394 = vmatpush1.bf16.msra.mxu0 0
    %395 = vmatprep.subr.bf16.mxu0 0
    %396 = vmatpush1.bf16.msra.mxu0 0
    %397 = vmatprep.subr.bf16.mxu0 0
    %398 = vmatpush1.bf16.msra.mxu0 0
    %399 = vmatprep.subr.bf16.mxu0 0
    %400 = vmatpush1.bf16.msra.mxu0 0
    %401 = vmatprep.subr.bf16.mxu0 0
    %402 = vmatpush1.bf16.msra.mxu0 0
    %403 = vmatprep.subr.bf16.mxu0 0
    %404 = vmatpush1.bf16.msra.mxu0 0
    %405 = vmatprep.subr.bf16.mxu0 0
    %406 = vmatpush1.bf16.msra.mxu0 0
    %407 = vmatprep.mubr.bf16.mxu0 0
    %408 = vmatmul.mubr.bf16.gmra.mrb[0].mxu0 %v130
    %v409 = vpop.f32.mrb[0].mxu0
    %v410 = vadd.f32 %v361, %v409
    %v411 = vpop.f32.mrb[0].mxu0
    %v412 = vpop.f32.mrb[0].mxu0
    %v413 = vadd.f32 %v364, %v412
    %v414 = vpop.f32.mrb[0].mxu0
    %415 = vmatprep.mubr.bf16.mxu0 0
    %416 = vmatmul.mubr.bf16.gmra.mrb[0].mxu0 %v133
    %v417 = vpop.f32.mrb[0].mxu0
    %v418 = vadd.f32 %v369, %v417
    %v419 = vpop.f32.mrb[0].mxu0
    %v420 = vpop.f32.mrb[0].mxu0
    %v421 = vadd.f32 %v372, %v420
    %v422 = vpop.f32.mrb[0].mxu0
    %423 = vdwg.mxu0
    %v424 = vadd.f32 %v410, %v413
    %v425 = vadd.f32 %v424, %v418
    %v426 = vadd.f32 %v425, %v421
    %v427 = vrot.slane %v426, 4
    %v428 = vadd.f32 %v426, %v427
    %v429 = vrot.slane %v428, 2
    %v430 = vadd.f32 %v428, %v429
    %v431 = vrot.slane %v430, 1
    %v432 = vadd.f32 %v430, %v431
    %v433 = vmul.f32 %v410, %v410
    %v434 = vmul.f32 %v413, %v413
    %v435 = vmul.f32 %v418, %v418
    %v436 = vmul.f32 %v421, %v421
    %v437 = vadd.f32 %v433, %v434
    %v438 = vadd.f32 %v437, %v435
    %v439 = vadd.f32 %v438, %v436
    %v440 = vrot.slane %v439, 4
    %v441 = vadd.f32 %v439, %v440
    %v442 = vrot.slane %v441, 2
    %v443 = vadd.f32 %v441, %v442
    %v444 = vrot.slane %v443, 1
    %v445 = vadd.f32 %v443, %v444
    %447 = vrot.lane.b32.xlu0 %v432, 120
    %v448 = vpop.permute.xlu0 %447
    %v450 = vadd.f32 %v432, %v448
    %452 = vrot.lane.b32.xlu0 %v445, 120
    %v453 = vpop.permute.xlu0 %452
    %v455 = vadd.f32 %v445, %v453
    %456 = vrot.lane.b32.xlu0 %v432, 112
    %v457 = vpop.permute.xlu0 %456
    %v459 = vadd.f32 %v450, %v457
    %460 = vrot.lane.b32.xlu0 %v445, 112
    %v461 = vpop.permute.xlu0 %460
    %v463 = vadd.f32 %v455, %v461
    %464 = vrot.lane.b32.xlu0 %v432, 104
    %v465 = vpop.permute.xlu0 %464
    %v467 = vadd.f32 %v459, %v465
    %468 = vrot.lane.b32.xlu0 %v445, 104
    %v469 = vpop.permute.xlu0 %468
    %v471 = vadd.f32 %v463, %v469
    %472 = vrot.lane.b32.xlu0 %v432, 96
    %v473 = vpop.permute.xlu0 %472
    %v475 = vadd.f32 %v467, %v473
    %476 = vrot.lane.b32.xlu0 %v445, 96
    %v477 = vpop.permute.xlu0 %476
    %v479 = vadd.f32 %v471, %v477
    %480 = vrot.lane.b32.xlu0 %v432, 88
    %v481 = vpop.permute.xlu0 %480
    %v483 = vadd.f32 %v475, %v481
    %484 = vrot.lane.b32.xlu0 %v445, 88
    %v485 = vpop.permute.xlu0 %484
    %v487 = vadd.f32 %v479, %v485
    %488 = vrot.lane.b32.xlu0 %v432, 80
    %v489 = vpop.permute.xlu0 %488
    %v491 = vadd.f32 %v483, %v489
    %492 = vrot.lane.b32.xlu0 %v445, 80
    %v493 = vpop.permute.xlu0 %492
    %v495 = vadd.f32 %v487, %v493
    %496 = vrot.lane.b32.xlu0 %v432, 72
    %v497 = vpop.permute.xlu0 %496
    %v499 = vadd.f32 %v491, %v497
    %500 = vrot.lane.b32.xlu0 %v445, 72
    %v501 = vpop.permute.xlu0 %500
    %v503 = vadd.f32 %v495, %v501
    %504 = vrot.lane.b32.xlu0 %v432, 64
    %v505 = vpop.permute.xlu0 %504
    %v507 = vadd.f32 %v499, %v505
    %508 = vrot.lane.b32.xlu0 %v445, 64
    %v509 = vpop.permute.xlu0 %508
    %v511 = vadd.f32 %v503, %v509
    %512 = vrot.lane.b32.xlu0 %v432, 56
    %v513 = vpop.permute.xlu0 %512
    %v515 = vadd.f32 %v507, %v513
    %516 = vrot.lane.b32.xlu0 %v445, 56
    %v517 = vpop.permute.xlu0 %516
    %v519 = vadd.f32 %v511, %v517
    %520 = vrot.lane.b32.xlu0 %v432, 48
    %v521 = vpop.permute.xlu0 %520
    %v523 = vadd.f32 %v515, %v521
    %524 = vrot.lane.b32.xlu0 %v445, 48
    %v525 = vpop.permute.xlu0 %524
    %v527 = vadd.f32 %v519, %v525
    %528 = vrot.lane.b32.xlu0 %v432, 40
    %v529 = vpop.permute.xlu0 %528
    %v531 = vadd.f32 %v523, %v529
    %532 = vrot.lane.b32.xlu0 %v445, 40
    %v533 = vpop.permute.xlu0 %532
    %v535 = vadd.f32 %v527, %v533
    %536 = vrot.lane.b32.xlu0 %v432, 32
    %v537 = vpop.permute.xlu0 %536
    %v539 = vadd.f32 %v531, %v537
    %540 = vrot.lane.b32.xlu0 %v445, 32
    %v541 = vpop.permute.xlu0 %540
    %v543 = vadd.f32 %v535, %v541
    %544 = vrot.lane.b32.xlu0 %v432, 24
    %v545 = vpop.permute.xlu0 %544
    %v547 = vadd.f32 %v539, %v545
    %548 = vrot.lane.b32.xlu0 %v445, 24
    %v549 = vpop.permute.xlu0 %548
    %v551 = vadd.f32 %v543, %v549
    %552 = vrot.lane.b32.xlu0 %v432, 16
    %v553 = vpop.permute.xlu0 %552
    %v555 = vadd.f32 %v547, %v553
    %556 = vrot.lane.b32.xlu0 %v445, 16
    %v557 = vpop.permute.xlu0 %556
    %v559 = vadd.f32 %v551, %v557
    %560 = vrot.lane.b32.xlu0 %v432, 8
    %v561 = vpop.permute.xlu0 %560
    %v563 = vadd.f32 %v555, %v561
    %564 = vrot.lane.b32.xlu0 %v445, 8
    %v565 = vpop.permute.xlu0 %564
    %v567 = vadd.f32 %v559, %v565
    %v568 = vmul.f32 %v563, 0.001953125
    %v569 = vmul.f32 %v567, 0.001953125
    %v570 = vmul.f32 %v568, %v568
    %v571 = vsub.f32 %v569, %v570
    %v572 = vld [vmem:[%s2] sm:$0x1]
    %v573 = vadd.f32 %v571, 1e-05
    %v574 = vrsqrt.pop %v573
    %v575 = vmul.f32 %v572, %v574
    %v576 = vld [vmem:[%s3] sm:$0x1]
    %v577 = vmul.f32 %v568, %v575
    %v578 = vsub.f32 %v576, %v577
    %v580 = vlaneseq
    %v581 = vshrl.u32 %v580, 7
    %v582 = vsub.s32 0, %v581
    %v583 = vrot.slane %v575, %v582
    %584 = vrot.lane.b32.xlu0 %v583, 8
    %v585 = vpop.permute.xlu0 %584
    %587 = vrot.lane.b32.xlu0 %v583, 16
    %v588 = vpop.permute.xlu0 %587
    %590 = vrot.lane.b32.xlu0 %v583, 24
    %v591 = vpop.permute.xlu0 %590
    %593 = vrot.lane.b32.xlu0 %v583, 32
    %v594 = vpop.permute.xlu0 %593
    %596 = vrot.lane.b32.xlu0 %v583, 40
    %v597 = vpop.permute.xlu0 %596
    %599 = vrot.lane.b32.xlu0 %v583, 48
    %v600 = vpop.permute.xlu0 %599
    %602 = vrot.lane.b32.xlu0 %v583, 56
    %v603 = vpop.permute.xlu0 %602
    %605 = vrot.lane.b32.xlu0 %v583, 64
    %v606 = vpop.permute.xlu0 %605
    %608 = vrot.lane.b32.xlu0 %v583, 72
    %v609 = vpop.permute.xlu0 %608
    %611 = vrot.lane.b32.xlu0 %v583, 80
    %v612 = vpop.permute.xlu0 %611
    %614 = vrot.lane.b32.xlu0 %v583, 88
    %v615 = vpop.permute.xlu0 %614
    %617 = vrot.lane.b32.xlu0 %v583, 96
    %v618 = vpop.permute.xlu0 %617
    %620 = vrot.lane.b32.xlu0 %v583, 104
    %v621 = vpop.permute.xlu0 %620
    %623 = vrot.lane.b32.xlu0 %v583, 112
    %v624 = vpop.permute.xlu0 %623
    %626 = vrot.lane.b32.xlu0 %v583, 120
    %v627 = vpop.permute.xlu0 %626
    %vm629 = vcmask 64512
    %v630 = vsel %vm629, %v575, %v585
    %vm631 = vcmask 130048
    %v632 = vsel %vm631, %v630, %v588
    %vm633 = vcmask 195584
    %v634 = vsel %vm633, %v632, %v591
    %vm635 = vcmask 261120
    %v636 = vsel %vm635, %v634, %v594
    %vm637 = vcmask 326656
    %v638 = vsel %vm637, %v636, %v597
    %vm639 = vcmask 392192
    %v640 = vsel %vm639, %v638, %v600
    %vm641 = vcmask 457728
    %v642 = vsel %vm641, %v640, %v603
    %vm643 = vcmask 523264
    %v644 = vsel %vm643, %v642, %v606
    %vm645 = vcmask 588800
    %v646 = vsel %vm645, %v644, %v609
    %vm647 = vcmask 654336
    %v648 = vsel %vm647, %v646, %v612
    %vm649 = vcmask 719872
    %v650 = vsel %vm649, %v648, %v615
    %vm651 = vcmask 785408
    %v652 = vsel %vm651, %v650, %v618
    %vm653 = vcmask 850944
    %v654 = vsel %vm653, %v652, %v621
    %vm655 = vcmask 916480
    %v656 = vsel %vm655, %v654, %v624
    %vm657 = vcmask 982016
    %v658 = vsel %vm657, %v656, %v627
    %v660 = vlaneseq
    %v661 = vshrl.u32 %v660, 7
    %v662 = vsub.s32 0, %v661
    %v663 = vrot.slane %v578, %v662
    %664 = vrot.lane.b32.xlu0 %v663, 8
    %v665 = vpop.permute.xlu0 %664
    %667 = vrot.lane.b32.xlu0 %v663, 16
    %v668 = vpop.permute.xlu0 %667
    %670 = vrot.lane.b32.xlu0 %v663, 24
    %v671 = vpop.permute.xlu0 %670
    %673 = vrot.lane.b32.xlu0 %v663, 32
    %v674 = vpop.permute.xlu0 %673
    %676 = vrot.lane.b32.xlu0 %v663, 40
    %v677 = vpop.permute.xlu0 %676
    %679 = vrot.lane.b32.xlu0 %v663, 48
    %v680 = vpop.permute.xlu0 %679
    %682 = vrot.lane.b32.xlu0 %v663, 56
    %v683 = vpop.permute.xlu0 %682
    %685 = vrot.lane.b32.xlu0 %v663, 64
    %v686 = vpop.permute.xlu0 %685
    %688 = vrot.lane.b32.xlu0 %v663, 72
    %v689 = vpop.permute.xlu0 %688
    %691 = vrot.lane.b32.xlu0 %v663, 80
    %v692 = vpop.permute.xlu0 %691
    %694 = vrot.lane.b32.xlu0 %v663, 88
    %v695 = vpop.permute.xlu0 %694
    %697 = vrot.lane.b32.xlu0 %v663, 96
    %v698 = vpop.permute.xlu0 %697
    %700 = vrot.lane.b32.xlu0 %v663, 104
    %v701 = vpop.permute.xlu0 %700
    %703 = vrot.lane.b32.xlu0 %v663, 112
    %v704 = vpop.permute.xlu0 %703
    %706 = vrot.lane.b32.xlu0 %v663, 120
    %v707 = vpop.permute.xlu0 %706
    %v709 = vsel %vm629, %v578, %v665
    %v710 = vsel %vm631, %v709, %v668
    %v711 = vsel %vm633, %v710, %v671
    %v712 = vsel %vm635, %v711, %v674
    %v713 = vsel %vm637, %v712, %v677
    %v714 = vsel %vm639, %v713, %v680
    %v715 = vsel %vm641, %v714, %v683
    %v716 = vsel %vm643, %v715, %v686
    %v717 = vsel %vm645, %v716, %v689
    %v718 = vsel %vm647, %v717, %v692
    %v719 = vsel %vm649, %v718, %v695
    %v720 = vsel %vm651, %v719, %v698
    %v721 = vsel %vm653, %v720, %v701
    %v722 = vsel %vm655, %v721, %v704
    %v723 = vsel %vm657, %v722, %v707
    %v724 = vlaneseq
    %v725 = vshrl.u32 %v724, 7
    %v726 = vsub.s32 0, %v725
    %v727 = vrot.slane %v658, %v726
    %v728 = vmul.f32 %v410, %v727
    %v729 = vmul.f32 %v413, %v727
    %v730 = vmul.f32 %v418, %v727
    %v731 = vmul.f32 %v421, %v727
    %v732 = vlaneseq
    %v733 = vshrl.u32 %v732, 7
    %v734 = vsub.s32 0, %v733
    %v735 = vrot.slane %v723, %v734
    %v736 = vadd.f32 %v728, %v735
    %v737 = vadd.f32 %v729, %v735
    %v738 = vadd.f32 %v730, %v735
    %v739 = vadd.f32 %v731, %v735
    %v740 = vmax.f32 %v736, 0.0
    %v741 = vmax.f32 %v737, 0.0
    %v742 = vmax.f32 %v738, 0.0
    %v743 = vmax.f32 %v739, 0.0
    %v748 = vrot.slane %v740, 7
    %v749 = vrot.slane %v741, 7
    %v750 = vsel %vm77, %v748, %v749
    %v751 = vrot.slane %v742, 7
    %v752 = vrot.slane %v743, 7
    %v753 = vsel %vm77, %v751, %v752
    %v760 = vsel %vm77, 0.0, %v748
    %v761 = vsel %vm77, 0.0, %v751
    %v762 = vsel %vm77, %v749, 0.0
    %v763 = vsel %vm77, %v752, 0.0
    %v768 = vrot.slane %v760, 1
    %v769 = vrot.slane %v750, 1
    %v770 = vsel %vm98, %v768, %v769
    %v771 = vrot.slane %v762, 1
    %v772 = vsel %vm98, %v769, %v771
    %v773 = vrot.slane %v761, 1
    %v774 = vrot.slane %v753, 1
    %v775 = vsel %vm98, %v773, %v774
    %v776 = vrot.slane %v763, 1
    %v777 = vsel %vm98, %v774, %v776
    %v782 = vrot.slane %v760, 2
    %v783 = vrot.slane %v750, 2
    %v784 = vsel %vm113, %v782, %v783
    %v785 = vrot.slane %v762, 2
    %v786 = vsel %vm113, %v783, %v785
    %v787 = vrot.slane %v761, 2
    %v788 = vrot.slane %v753, 2
    %v789 = vsel %vm113, %v787, %v788
    %v790 = vrot.slane %v763, 2
    %v791 = vsel %vm113, %v788, %v790
    %v796 = vpack.c.bf16 %v750, %v760
    %v797 = vpack.c.bf16 %v772, %v770
    %v798 = vpack.c.bf16 %v786, %v784
    %v799 = vpack.c.bf16 %v753, %v761
    %v800 = vpack.c.bf16 %v777, %v775
    %v801 = vpack.c.bf16 %v791, %v789
    %v802 = vld [vmem:[#allocation7] sm:$0xf]
    %v803 = vld [vmem:[#allocation7 + $0x4] sm:$0xf]
    %v804 = vld [vmem:[#allocation7 + $0x8] sm:$0xf]
    %v805 = vld [vmem:[#allocation7 + $0xc] sm:$0xf]
    %v806 = vld [vmem:[#allocation7 + $0x10] sm:$0xf]
    %v807 = vld [vmem:[#allocation7 + $0x14] sm:$0xf]
    %v808 = vld [vmem:[#allocation7 + $0x18] sm:$0xf]
    %v809 = vld [vmem:[#allocation7 + $0x1c] sm:$0xf]
    %v810 = vld [vmem:[#allocation7 + $0x20] sm:$0xf]
    %v811 = vld [vmem:[#allocation7 + $0x24] sm:$0xf]
    %v812 = vld [vmem:[#allocation7 + $0x28] sm:$0xf]
    %v813 = vld [vmem:[#allocation7 + $0x2c] sm:$0xf]
    %v814 = vld [vmem:[#allocation7 + $0x30] sm:$0xf]
    %v815 = vld [vmem:[#allocation7 + $0x34] sm:$0xf]
    %v816 = vld [vmem:[#allocation7 + $0x38] sm:$0xf]
    %v817 = vld [vmem:[#allocation7 + $0x3c] sm:$0xf]
    %v818 = vld [vmem:[#allocation7 + $0x40] sm:$0xf]
    %v819 = vld [vmem:[#allocation7 + $0x44] sm:$0xf]
    %v820 = vld [vmem:[#allocation7 + $0x48] sm:$0xf]
    %v821 = vld [vmem:[#allocation7 + $0x4c] sm:$0xf]
    %v822 = vld [vmem:[#allocation7 + $0x50] sm:$0xf]
    %v823 = vld [vmem:[#allocation7 + $0x54] sm:$0xf]
    %v824 = vld [vmem:[#allocation7 + $0x58] sm:$0xf]
    %v825 = vld [vmem:[#allocation7 + $0x5c] sm:$0xf]
    %v826 = vld [vmem:[#allocation7 + $0x60] sm:$0xf]
    %v827 = vld [vmem:[#allocation7 + $0x64] sm:$0xf]
    %v828 = vld [vmem:[#allocation7 + $0x68] sm:$0xf]
    %v829 = vld [vmem:[#allocation7 + $0x6c] sm:$0xf]
    %v830 = vld [vmem:[#allocation7 + $0x70] sm:$0xf]
    %v831 = vld [vmem:[#allocation7 + $0x74] sm:$0xf]
    %v832 = vld [vmem:[#allocation7 + $0x78] sm:$0xf]
    %v833 = vld [vmem:[#allocation7 + $0x7c] sm:$0xf]
    %v834 = vld [vmem:[#allocation7 + $0x80] sm:$0xf]
    %v835 = vld [vmem:[#allocation7 + $0x84] sm:$0xf]
    %v836 = vld [vmem:[#allocation7 + $0x88] sm:$0xf]
    %v837 = vld [vmem:[#allocation7 + $0x8c] sm:$0xf]
    %v838 = vld [vmem:[#allocation7 + $0x90] sm:$0xf]
    %v839 = vld [vmem:[#allocation7 + $0x94] sm:$0xf]
    %v840 = vld [vmem:[#allocation7 + $0x98] sm:$0xf]
    %v841 = vld [vmem:[#allocation7 + $0x9c] sm:$0xf]
    %v842 = vld [vmem:[#allocation7 + $0xa0] sm:$0xf]
    %v843 = vld [vmem:[#allocation7 + $0xa4] sm:$0xf]
    %v844 = vld [vmem:[#allocation7 + $0xa8] sm:$0xf]
    %v845 = vld [vmem:[#allocation7 + $0xac] sm:$0xf]
    %v846 = vld [vmem:[#allocation7 + $0xb0] sm:$0xf]
    %v847 = vld [vmem:[#allocation7 + $0xb4] sm:$0xf]
    %v848 = vld [vmem:[#allocation7 + $0xb8] sm:$0xf]
    %v849 = vld [vmem:[#allocation7 + $0xbc] sm:$0xf]
    %v898 = vunpack.c.l.b16 %v802
    %v899 = vunpack.c.l.b16 %v803
    %v900 = vunpack.c.l.b16 %v804
    %v901 = vunpack.c.l.b16 %v805
    %v902 = vunpack.c.l.b16 %v806
    %v903 = vunpack.c.l.b16 %v807
    %v904 = vunpack.c.l.b16 %v808
    %v905 = vunpack.c.l.b16 %v809
    %v906 = vunpack.c.l.b16 %v810
    %v907 = vunpack.c.l.b16 %v811
    %v908 = vunpack.c.l.b16 %v812
    %v909 = vunpack.c.l.b16 %v813
    %v910 = vunpack.c.l.b16 %v814
    %v911 = vunpack.c.l.b16 %v815
    %v912 = vunpack.c.l.b16 %v816
    %v913 = vunpack.c.l.b16 %v817
    %v914 = vunpack.c.l.b16 %v818
    %v915 = vunpack.c.l.b16 %v819
    %v916 = vunpack.c.l.b16 %v820
    %v917 = vunpack.c.l.b16 %v821
    %v918 = vunpack.c.l.b16 %v822
    %v919 = vunpack.c.l.b16 %v823
    %v920 = vunpack.c.l.b16 %v824
    %v921 = vunpack.c.l.b16 %v825
    %v922 = vunpack.c.l.b16 %v826
    %v923 = vunpack.c.l.b16 %v827
    %v924 = vunpack.c.l.b16 %v828
    %v925 = vunpack.c.l.b16 %v829
    %v926 = vunpack.c.l.b16 %v830
    %v927 = vunpack.c.l.b16 %v831
    %v928 = vunpack.c.l.b16 %v832
    %v929 = vunpack.c.l.b16 %v833
    %v930 = vunpack.c.l.b16 %v834
    %v931 = vunpack.c.l.b16 %v835
    %v932 = vunpack.c.l.b16 %v836
    %v933 = vunpack.c.l.b16 %v837
    %v934 = vunpack.c.l.b16 %v838
    %v935 = vunpack.c.l.b16 %v839
    %v936 = vunpack.c.l.b16 %v840
    %v937 = vunpack.c.l.b16 %v841
    %v938 = vunpack.c.l.b16 %v842
    %v939 = vunpack.c.l.b16 %v843
    %v940 = vunpack.c.l.b16 %v844
    %v941 = vunpack.c.l.b16 %v845
    %v942 = vunpack.c.l.b16 %v846
    %v943 = vunpack.c.l.b16 %v847
    %v944 = vunpack.c.l.b16 %v848
    %v945 = vunpack.c.l.b16 %v849
    %v946 = vpack.c.b16 %v899, %v898
    %v947 = vpack.c.b16 %v901, %v900
    %v948 = vpack.c.b16 %v903, %v902
    %v949 = vpack.c.b16 %v905, %v904
    %v950 = vpack.c.b16 %v907, %v906
    %v951 = vpack.c.b16 %v909, %v908
    %v952 = vpack.c.b16 %v911, %v910
    %v953 = vpack.c.b16 %v913, %v912
    %v954 = vpack.c.b16 %v915, %v914
    %v955 = vpack.c.b16 %v917, %v916
    %v956 = vpack.c.b16 %v919, %v918
    %v957 = vpack.c.b16 %v921, %v920
    %v958 = vpack.c.b16 %v923, %v922
    %v959 = vpack.c.b16 %v925, %v924
    %v960 = vpack.c.b16 %v927, %v926
    %v961 = vpack.c.b16 %v929, %v928
    %v962 = vpack.c.b16 %v931, %v930
    %v963 = vpack.c.b16 %v933, %v932
    %v964 = vpack.c.b16 %v935, %v934
    %v965 = vpack.c.b16 %v937, %v936
    %v966 = vpack.c.b16 %v939, %v938
    %v967 = vpack.c.b16 %v941, %v940
    %v968 = vpack.c.b16 %v943, %v942
    %v969 = vpack.c.b16 %v945, %v944
    %994 = vmatprep.subr.bf16.mxu0 0
    %995 = vmatpush1.bf16.msra.mxu0 %v946
    %996 = vmatprep.subr.bf16.mxu0 0
    %997 = vmatpush1.bf16.msra.mxu0 %v947
    %998 = vmatprep.subr.bf16.mxu0 0
    %999 = vmatpush1.bf16.msra.mxu0 %v948
    %1000 = vmatprep.subr.bf16.mxu0 0
    %1001 = vmatpush1.bf16.msra.mxu0 %v949
    %1002 = vmatprep.subr.bf16.mxu0 0
    %1003 = vmatpush1.bf16.msra.mxu0 %v950
    %1004 = vmatprep.subr.bf16.mxu0 0
    %1005 = vmatpush1.bf16.msra.mxu0 %v951
    %1006 = vmatprep.subr.bf16.mxu0 0
    %1007 = vmatpush1.bf16.msra.mxu0 %v952
    %1008 = vmatprep.subr.bf16.mxu0 0
    %1009 = vmatpush1.bf16.msra.mxu0 %v953
    %1010 = vmatprep.subr.bf16.mxu0 0
    %1011 = vmatpush1.bf16.msra.mxu0 %v954
    %1012 = vmatprep.subr.bf16.mxu0 0
    %1013 = vmatpush1.bf16.msra.mxu0 %v955
    %1014 = vmatprep.subr.bf16.mxu0 0
    %1015 = vmatpush1.bf16.msra.mxu0 %v956
    %1016 = vmatprep.subr.bf16.mxu0 0
    %1017 = vmatpush1.bf16.msra.mxu0 %v957
    %1018 = vmatprep.subr.bf16.mxu0 0
    %1019 = vmatpush1.bf16.msra.mxu0 %v958
    %1020 = vmatprep.subr.bf16.mxu0 0
    %1021 = vmatpush1.bf16.msra.mxu0 %v959
    %1022 = vmatprep.subr.bf16.mxu0 0
    %1023 = vmatpush1.bf16.msra.mxu0 %v960
    %1024 = vmatprep.subr.bf16.mxu0 0
    %1025 = vmatpush1.bf16.msra.mxu0 %v961
    %1026 = vmatprep.mubr.bf16.mxu0 %v797
    %1027 = vmatmul.mubr.bf16.gmra.mrb[0].mxu0 %v796
    %v1028 = vpop.f32.mrb[0].mxu0
    %v1029 = vadd.f32 0.0, %v1028
    %v1030 = vpop.f32.mrb[0].mxu0
    %v1031 = vpop.f32.mrb[0].mxu0
    %v1032 = vadd.f32 0.0, %v1031
    %v1033 = vpop.f32.mrb[0].mxu0
    %1034 = vmatprep.mubr.bf16.mxu0 %v800
    %1035 = vmatmul.mubr.bf16.gmra.mrb[0].mxu0 %v799
    %v1036 = vpop.f32.mrb[0].mxu0
    %v1037 = vadd.f32 0.0, %v1036
    %v1038 = vpop.f32.mrb[0].mxu0
    %v1039 = vpop.f32.mrb[0].mxu0
    %v1040 = vadd.f32 0.0, %v1039
    %v1041 = vpop.f32.mrb[0].mxu0
    %1042 = vdwg.mxu0
    %1043 = vmatprep.subr.bf16.mxu0 0
    %1044 = vmatpush1.bf16.msra.mxu0 %v962
    %1045 = vmatprep.subr.bf16.mxu0 0
    %1046 = vmatpush1.bf16.msra.mxu0 %v963
    %1047 = vmatprep.subr.bf16.mxu0 0
    %1048 = vmatpush1.bf16.msra.mxu0 %v964
    %1049 = vmatprep.subr.bf16.mxu0 0
    %1050 = vmatpush1.bf16.msra.mxu0 %v965
    %1051 = vmatprep.subr.bf16.mxu0 0
    %1052 = vmatpush1.bf16.msra.mxu0 %v966
    %1053 = vmatprep.subr.bf16.mxu0 0
    %1054 = vmatpush1.bf16.msra.mxu0 %v967
    %1055 = vmatprep.subr.bf16.mxu0 0
    %1056 = vmatpush1.bf16.msra.mxu0 %v968
    %1057 = vmatprep.subr.bf16.mxu0 0
    %1058 = vmatpush1.bf16.msra.mxu0 %v969
    %1059 = vmatprep.subr.bf16.mxu0 0
    %1060 = vmatpush1.bf16.msra.mxu0 0
    %1061 = vmatprep.subr.bf16.mxu0 0
    %1062 = vmatpush1.bf16.msra.mxu0 0
    %1063 = vmatprep.subr.bf16.mxu0 0
    %1064 = vmatpush1.bf16.msra.mxu0 0
    %1065 = vmatprep.subr.bf16.mxu0 0
    %1066 = vmatpush1.bf16.msra.mxu0 0
    %1067 = vmatprep.subr.bf16.mxu0 0
    %1068 = vmatpush1.bf16.msra.mxu0 0
    %1069 = vmatprep.subr.bf16.mxu0 0
    %1070 = vmatpush1.bf16.msra.mxu0 0
    %1071 = vmatprep.subr.bf16.mxu0 0
    %1072 = vmatpush1.bf16.msra.mxu0 0
    %1073 = vmatprep.subr.bf16.mxu0 0
    %1074 = vmatpush1.bf16.msra.mxu0 0
    %1075 = vmatprep.mubr.bf16.mxu0 0
    %1076 = vmatmul.mubr.bf16.gmra.mrb[0].mxu0 %v798
    %v1077 = vpop.f32.mrb[0].mxu0
    %v1078 = vadd.f32 %v1029, %v1077
    %v1079 = vpop.f32.mrb[0].mxu0
    %v1080 = vpop.f32.mrb[0].mxu0
    %v1081 = vadd.f32 %v1032, %v1080
    %v1082 = vpop.f32.mrb[0].mxu0
    %1083 = vmatprep.mubr.bf16.mxu0 0
    %1084 = vmatmul.mubr.bf16.gmra.mrb[0].mxu0 %v801
    %v1085 = vpop.f32.mrb[0].mxu0
    %v1086 = vadd.f32 %v1037, %v1085
    %v1087 = vpop.f32.mrb[0].mxu0
    %v1088 = vpop.f32.mrb[0].mxu0
    %v1089 = vadd.f32 %v1040, %v1088
    %v1090 = vpop.f32.mrb[0].mxu0
    %1091 = vdwg.mxu0
    %v1092 = vadd.f32 %v1078, %v1081
    %v1093 = vadd.f32 %v1092, %v1086
    %v1094 = vadd.f32 %v1093, %v1089
    %v1095 = vrot.slane %v1094, 4
    %v1096 = vadd.f32 %v1094, %v1095
    %v1097 = vrot.slane %v1096, 2
    %v1098 = vadd.f32 %v1096, %v1097
    %v1099 = vrot.slane %v1098, 1
    %v1100 = vadd.f32 %v1098, %v1099
    %v1101 = vmul.f32 %v1078, %v1078
    %v1102 = vmul.f32 %v1081, %v1081
    %v1103 = vmul.f32 %v1086, %v1086
    %v1104 = vmul.f32 %v1089, %v1089
    %v1105 = vadd.f32 %v1101, %v1102
    %v1106 = vadd.f32 %v1105, %v1103
    %v1107 = vadd.f32 %v1106, %v1104
    %v1108 = vrot.slane %v1107, 4
    %v1109 = vadd.f32 %v1107, %v1108
    %v1110 = vrot.slane %v1109, 2
    %v1111 = vadd.f32 %v1109, %v1110
    %v1112 = vrot.slane %v1111, 1
    %v1113 = vadd.f32 %v1111, %v1112
    %1115 = vrot.lane.b32.xlu0 %v1100, 120
    %v1116 = vpop.permute.xlu0 %1115
    %v1118 = vadd.f32 %v1100, %v1116
    %1120 = vrot.lane.b32.xlu0 %v1113, 120
    %v1121 = vpop.permute.xlu0 %1120
    %v1123 = vadd.f32 %v1113, %v1121
    %1124 = vrot.lane.b32.xlu0 %v1100, 112
    %v1125 = vpop.permute.xlu0 %1124
    %v1127 = vadd.f32 %v1118, %v1125
    %1128 = vrot.lane.b32.xlu0 %v1113, 112
    %v1129 = vpop.permute.xlu0 %1128
    %v1131 = vadd.f32 %v1123, %v1129
    %1132 = vrot.lane.b32.xlu0 %v1100, 104
    %v1133 = vpop.permute.xlu0 %1132
    %v1135 = vadd.f32 %v1127, %v1133
    %1136 = vrot.lane.b32.xlu0 %v1113, 104
    %v1137 = vpop.permute.xlu0 %1136
    %v1139 = vadd.f32 %v1131, %v1137
    %1140 = vrot.lane.b32.xlu0 %v1100, 96
    %v1141 = vpop.permute.xlu0 %1140
    %v1143 = vadd.f32 %v1135, %v1141
    %1144 = vrot.lane.b32.xlu0 %v1113, 96
    %v1145 = vpop.permute.xlu0 %1144
    %v1147 = vadd.f32 %v1139, %v1145
    %1148 = vrot.lane.b32.xlu0 %v1100, 88
    %v1149 = vpop.permute.xlu0 %1148
    %v1151 = vadd.f32 %v1143, %v1149
    %1152 = vrot.lane.b32.xlu0 %v1113, 88
    %v1153 = vpop.permute.xlu0 %1152
    %v1155 = vadd.f32 %v1147, %v1153
    %1156 = vrot.lane.b32.xlu0 %v1100, 80
    %v1157 = vpop.permute.xlu0 %1156
    %v1159 = vadd.f32 %v1151, %v1157
    %1160 = vrot.lane.b32.xlu0 %v1113, 80
    %v1161 = vpop.permute.xlu0 %1160
    %v1163 = vadd.f32 %v1155, %v1161
    %1164 = vrot.lane.b32.xlu0 %v1100, 72
    %v1165 = vpop.permute.xlu0 %1164
    %v1167 = vadd.f32 %v1159, %v1165
    %1168 = vrot.lane.b32.xlu0 %v1113, 72
    %v1169 = vpop.permute.xlu0 %1168
    %v1171 = vadd.f32 %v1163, %v1169
    %1172 = vrot.lane.b32.xlu0 %v1100, 64
    %v1173 = vpop.permute.xlu0 %1172
    %v1175 = vadd.f32 %v1167, %v1173
    %1176 = vrot.lane.b32.xlu0 %v1113, 64
    %v1177 = vpop.permute.xlu0 %1176
    %v1179 = vadd.f32 %v1171, %v1177
    %1180 = vrot.lane.b32.xlu0 %v1100, 56
    %v1181 = vpop.permute.xlu0 %1180
    %v1183 = vadd.f32 %v1175, %v1181
    %1184 = vrot.lane.b32.xlu0 %v1113, 56
    %v1185 = vpop.permute.xlu0 %1184
    %v1187 = vadd.f32 %v1179, %v1185
    %1188 = vrot.lane.b32.xlu0 %v1100, 48
    %v1189 = vpop.permute.xlu0 %1188
    %v1191 = vadd.f32 %v1183, %v1189
    %1192 = vrot.lane.b32.xlu0 %v1113, 48
    %v1193 = vpop.permute.xlu0 %1192
    %v1195 = vadd.f32 %v1187, %v1193
    %1196 = vrot.lane.b32.xlu0 %v1100, 40
    %v1197 = vpop.permute.xlu0 %1196
    %v1199 = vadd.f32 %v1191, %v1197
    %1200 = vrot.lane.b32.xlu0 %v1113, 40
    %v1201 = vpop.permute.xlu0 %1200
    %v1203 = vadd.f32 %v1195, %v1201
    %1204 = vrot.lane.b32.xlu0 %v1100, 32
    %v1205 = vpop.permute.xlu0 %1204
    %v1207 = vadd.f32 %v1199, %v1205
    %1208 = vrot.lane.b32.xlu0 %v1113, 32
    %v1209 = vpop.permute.xlu0 %1208
    %v1211 = vadd.f32 %v1203, %v1209
    %1212 = vrot.lane.b32.xlu0 %v1100, 24
    %v1213 = vpop.permute.xlu0 %1212
    %v1215 = vadd.f32 %v1207, %v1213
    %1216 = vrot.lane.b32.xlu0 %v1113, 24
    %v1217 = vpop.permute.xlu0 %1216
    %v1219 = vadd.f32 %v1211, %v1217
    %1220 = vrot.lane.b32.xlu0 %v1100, 16
    %v1221 = vpop.permute.xlu0 %1220
    %v1223 = vadd.f32 %v1215, %v1221
    %1224 = vrot.lane.b32.xlu0 %v1113, 16
    %v1225 = vpop.permute.xlu0 %1224
    %v1227 = vadd.f32 %v1219, %v1225
    %1228 = vrot.lane.b32.xlu0 %v1100, 8
    %v1229 = vpop.permute.xlu0 %1228
    %v1231 = vadd.f32 %v1223, %v1229
    %1232 = vrot.lane.b32.xlu0 %v1113, 8
    %v1233 = vpop.permute.xlu0 %1232
    %v1235 = vadd.f32 %v1227, %v1233
    %v1236 = vmul.f32 %v1231, 0.001953125
    %v1237 = vmul.f32 %v1235, 0.001953125
    %v1238 = vmul.f32 %v1236, %v1236
    %v1239 = vsub.f32 %v1237, %v1238
    %v1240 = vld [vmem:[%s5] sm:$0x1]
    %v1241 = vadd.f32 %v1239, 1e-05
    %v1242 = vrsqrt.pop %v1241
    %v1243 = vmul.f32 %v1240, %v1242
    %v1244 = vld [vmem:[%s6] sm:$0x1]
    %v1245 = vmul.f32 %v1236, %v1243
    %v1246 = vsub.f32 %v1244, %v1245
    %v1248 = vlaneseq
    %v1249 = vshrl.u32 %v1248, 7
    %v1250 = vsub.s32 0, %v1249
    %v1251 = vrot.slane %v1243, %v1250
    %1252 = vrot.lane.b32.xlu0 %v1251, 8
    %v1253 = vpop.permute.xlu0 %1252
    %1255 = vrot.lane.b32.xlu0 %v1251, 16
    %v1256 = vpop.permute.xlu0 %1255
    %1258 = vrot.lane.b32.xlu0 %v1251, 24
    %v1259 = vpop.permute.xlu0 %1258
    %1261 = vrot.lane.b32.xlu0 %v1251, 32
    %v1262 = vpop.permute.xlu0 %1261
    %1264 = vrot.lane.b32.xlu0 %v1251, 40
    %v1265 = vpop.permute.xlu0 %1264
    %1267 = vrot.lane.b32.xlu0 %v1251, 48
    %v1268 = vpop.permute.xlu0 %1267
    %1270 = vrot.lane.b32.xlu0 %v1251, 56
    %v1271 = vpop.permute.xlu0 %1270
    %1273 = vrot.lane.b32.xlu0 %v1251, 64
    %v1274 = vpop.permute.xlu0 %1273
    %1276 = vrot.lane.b32.xlu0 %v1251, 72
    %v1277 = vpop.permute.xlu0 %1276
    %1279 = vrot.lane.b32.xlu0 %v1251, 80
    %v1280 = vpop.permute.xlu0 %1279
    %1282 = vrot.lane.b32.xlu0 %v1251, 88
    %v1283 = vpop.permute.xlu0 %1282
    %1285 = vrot.lane.b32.xlu0 %v1251, 96
    %v1286 = vpop.permute.xlu0 %1285
    %1288 = vrot.lane.b32.xlu0 %v1251, 104
    %v1289 = vpop.permute.xlu0 %1288
    %1291 = vrot.lane.b32.xlu0 %v1251, 112
    %v1292 = vpop.permute.xlu0 %1291
    %1294 = vrot.lane.b32.xlu0 %v1251, 120
    %v1295 = vpop.permute.xlu0 %1294
    %v1297 = vsel %vm629, %v1243, %v1253
    %v1298 = vsel %vm631, %v1297, %v1256
    %v1299 = vsel %vm633, %v1298, %v1259
    %v1300 = vsel %vm635, %v1299, %v1262
    %v1301 = vsel %vm637, %v1300, %v1265
    %v1302 = vsel %vm639, %v1301, %v1268
    %v1303 = vsel %vm641, %v1302, %v1271
    %v1304 = vsel %vm643, %v1303, %v1274
    %v1305 = vsel %vm645, %v1304, %v1277
    %v1306 = vsel %vm647, %v1305, %v1280
    %v1307 = vsel %vm649, %v1306, %v1283
    %v1308 = vsel %vm651, %v1307, %v1286
    %v1309 = vsel %vm653, %v1308, %v1289
    %v1310 = vsel %vm655, %v1309, %v1292
    %v1311 = vsel %vm657, %v1310, %v1295
    %v1313 = vlaneseq
    %v1314 = vshrl.u32 %v1313, 7
    %v1315 = vsub.s32 0, %v1314
    %v1316 = vrot.slane %v1246, %v1315
    %1317 = vrot.lane.b32.xlu0 %v1316, 8
    %v1318 = vpop.permute.xlu0 %1317
    %1320 = vrot.lane.b32.xlu0 %v1316, 16
    %v1321 = vpop.permute.xlu0 %1320
    %1323 = vrot.lane.b32.xlu0 %v1316, 24
    %v1324 = vpop.permute.xlu0 %1323
    %1326 = vrot.lane.b32.xlu0 %v1316, 32
    %v1327 = vpop.permute.xlu0 %1326
    %1329 = vrot.lane.b32.xlu0 %v1316, 40
    %v1330 = vpop.permute.xlu0 %1329
    %1332 = vrot.lane.b32.xlu0 %v1316, 48
    %v1333 = vpop.permute.xlu0 %1332
    %1335 = vrot.lane.b32.xlu0 %v1316, 56
    %v1336 = vpop.permute.xlu0 %1335
    %1338 = vrot.lane.b32.xlu0 %v1316, 64
    %v1339 = vpop.permute.xlu0 %1338
    %1341 = vrot.lane.b32.xlu0 %v1316, 72
    %v1342 = vpop.permute.xlu0 %1341
    %1344 = vrot.lane.b32.xlu0 %v1316, 80
    %v1345 = vpop.permute.xlu0 %1344
    %1347 = vrot.lane.b32.xlu0 %v1316, 88
    %v1348 = vpop.permute.xlu0 %1347
    %1350 = vrot.lane.b32.xlu0 %v1316, 96
    %v1351 = vpop.permute.xlu0 %1350
    %1353 = vrot.lane.b32.xlu0 %v1316, 104
    %v1354 = vpop.permute.xlu0 %1353
    %1356 = vrot.lane.b32.xlu0 %v1316, 112
    %v1357 = vpop.permute.xlu0 %1356
    %1359 = vrot.lane.b32.xlu0 %v1316, 120
    %v1360 = vpop.permute.xlu0 %1359
    %v1362 = vsel %vm629, %v1246, %v1318
    %v1363 = vsel %vm631, %v1362, %v1321
    %v1364 = vsel %vm633, %v1363, %v1324
    %v1365 = vsel %vm635, %v1364, %v1327
    %v1366 = vsel %vm637, %v1365, %v1330
    %v1367 = vsel %vm639, %v1366, %v1333
    %v1368 = vsel %vm641, %v1367, %v1336
    %v1369 = vsel %vm643, %v1368, %v1339
    %v1370 = vsel %vm645, %v1369, %v1342
    %v1371 = vsel %vm647, %v1370, %v1345
    %v1372 = vsel %vm649, %v1371, %v1348
    %v1373 = vsel %vm651, %v1372, %v1351
    %v1374 = vsel %vm653, %v1373, %v1354
    %v1375 = vsel %vm655, %v1374, %v1357
    %v1376 = vsel %vm657, %v1375, %v1360
    %v1377 = vlaneseq
    %v1378 = vshrl.u32 %v1377, 7
    %v1379 = vsub.s32 0, %v1378
    %v1380 = vrot.slane %v1311, %v1379
    %v1381 = vmul.f32 %v1078, %v1380
    %v1382 = vmul.f32 %v1081, %v1380
    %v1383 = vmul.f32 %v1086, %v1380
    %v1384 = vmul.f32 %v1089, %v1380
    %v1385 = vlaneseq
    %v1386 = vshrl.u32 %v1385, 7
    %v1387 = vsub.s32 0, %v1386
    %v1388 = vrot.slane %v1376, %v1387
    %v1389 = vadd.f32 %v1381, %v1388
    %v1390 = vadd.f32 %v1382, %v1388
    %v1391 = vadd.f32 %v1383, %v1388
    %v1392 = vadd.f32 %v1384, %v1388
    %v1393 = vadd.f32 %v1389, %v69
    %v1394 = vadd.f32 %v1390, %v70
    %v1395 = vadd.f32 %v1391, %v71
    %v1396 = vadd.f32 %v1392, %v72
    %v1397 = vmax.f32 %v1393, 0.0
    %v1398 = vmax.f32 %v1394, 0.0
    %v1399 = vmax.f32 %v1395, 0.0
    %v1400 = vmax.f32 %v1396, 0.0
    %1401 = vst [vmem:[#allocation8] sm:$0xff] %v1397
    %1402 = vst [vmem:[#allocation8 + $0x8] sm:$0xff] %v1398
    %1403 = vst [vmem:[#allocation8 + $0x10] sm:$0xff] %v1399
    %1404 = vst [vmem:[#allocation8 + $0x18] sm:$0xff] %v1400
    // Predicated region
    $region42: #{tpu_custom_call.1} parent=1 // pred_check
      _
    $region43: #{tpu_custom_call.1} parent=1 // pred_check_branch
      %1406 = sbr.rel (0) target = $region45
    $region44: #{tpu_custom_call.1} parent=1 // pred_region
      %s1408 = ssub.s32 512, 512
      %1409 = vsyncadd [#allocation4], %s1408
      %s1410 = sshll.u32 [#allocation8], 4
      %s1411 = int_to_ptr.vmem [resolvable:$true] %s1410
      %1416 = dma.vmem_to_hbm [thread:$0]  %s1411, 512, %s7, [#allocation4], 128, 128, 8
    $region45: #{tpu_custom_call.1} parent=1 // pred_fallthru
      _
    // Predicated region
    $region46: #{tpu_custom_call.1} parent=1 // pred_check
      _
    $region47: #{tpu_custom_call.1} parent=1 // pred_check_branch
      %1418 = sbr.rel (0) target = $region49
    $region48: #{tpu_custom_call.1} parent=1 // pred_region
      %1419 = dma.done [#allocation4], 512
    $region49: #{tpu_custom_call.1} parent=1 // pred_fallthru
      _
    %1420 = vsyncpa [#allocation3], 1
    %1421 = vsyncpa [#allocation6], 1
    %1422 = vsyncpa [#allocation4], 1

</llo_original>
